<compile_context>
chip_gen: v7x
topology: tpu7x:2x2x1
jax: 0.10.0
libtpu: 0.0.40
codegen_flags: <defaults>
</compile_context>

<pallas_src>
import functools

import jax
import jax.numpy as jnp
from jax import lax
from jax.experimental import pallas as pl
from jax.experimental.pallas import tpu as pltpu

APAD = 128                        # action head padded to full lane width
TM_DEFAULT = 1024                 # row tile; blocks stay ~1 MiB per buffer
VMEM_LIMIT = 48 * 1024 * 1024     # safe on v5e/v6e (128 MiB) and v7x (64 MiB)


def _compiler_params(dimension_semantics):
    return pltpu.CompilerParams(dimension_semantics=dimension_semantics,
                                vmem_limit_bytes=VMEM_LIMIT)


def _choose_tm(m, max_tm=TM_DEFAULT):
    """Largest row tile <= max_tm; when M is large, keep >= 2 row tiles so the
    'parallel' axis can shard across both v7x TensorCores."""
    if m <= 128:
        return m
    tm = min(max_tm, m)
    if -(-m // tm) < 2:                          # would collapse to one tile
        tm = -(-((m + 1) // 2) // 8) * 8         # cdiv(m, 2) rounded up to 8
    return tm


# ----------------------------------------------------------------------------
# Pallas kernel 1: fused  y = relu(x @ w + b), M-tiled, weight VMEM-resident.
# Used for conv1 and conv2 (via im2col), emitting the TRUE channel count.
# ----------------------------------------------------------------------------
def _matmul_bias_relu_kernel(x_ref, w_ref, b_ref, o_ref, *, apply_relu):
    acc = jnp.dot(x_ref[...], w_ref[...], preferred_element_type=jnp.float32)
    acc = acc + b_ref[...]                       # (1, N) f32 broadcasts
    if apply_relu:
        acc = jnp.maximum(acc, 0.0)
    o_ref[...] = acc.astype(o_ref.dtype)


def pallas_matmul_bias_relu(x, w, b, *, relu, out_dtype, max_tm=TM_DEFAULT):
    """x: (M, K) bf16, w: (K, N) bf16, b: (1, N) f32 -> (M, N) out_dtype."""
    m, k = x.shape
    k2, n = w.shape
    assert k == k2 and b.shape == (1, n)
    tm = _choose_tm(m, max_tm)
    kernel = functools.partial(_matmul_bias_relu_kernel, apply_relu=relu)
    return pl.pallas_call(
        kernel,
        out_shape=jax.ShapeDtypeStruct((m, n), out_dtype),
        grid=(pl.cdiv(m, tm),),
        in_specs=[
            pl.BlockSpec((tm, k), lambda i: (i, 0)),
            pl.BlockSpec((k, n), lambda i: (0, 0)),   # weight stays resident
            pl.BlockSpec((1, n), lambda i: (0, 0)),
        ],
        out_specs=pl.BlockSpec((tm, n), lambda i: (i, 0)),
        compiler_params=_compiler_params(("parallel",)),
    )(x, w, b)


# ----------------------------------------------------------------------------
# Pallas kernel 2: fused conv3 + flatten + fc(+ReLU) + output head.
#   grid = (M tiles over batch, h3*w3 spatial positions)
#   per position p:  h_p = relu(patch_p @ w3 + b3)           (B, 64)
#                    acc += h_p @ wfc[p]                      (B, 512) f32
#   last position:   q = relu(acc + bfc) @ wout + bout        (B, APAD)
# ----------------------------------------------------------------------------
def _conv3_fc_head_kernel(p_ref, w3_ref, b3_ref, wfc_ref, bfc_ref,
                          wout_ref, bout_ref, o_ref, acc_ref):
    pos = pl.program_id(1)

    @pl.when(pos == 0)
    def _():
        acc_ref[...] = jnp.zeros_like(acc_ref)

    # conv3 at this spatial position: (tm, 3*3*64) @ (3*3*64, 64) + b3, ReLU.
    h = jnp.dot(p_ref[0], w3_ref[...], preferred_element_type=jnp.float32)
    h = jnp.maximum(h + b3_ref[...], 0.0)
    # Partial fc contraction over this position's 64 real channels.
    acc_ref[...] += jnp.dot(h.astype(wfc_ref.dtype), wfc_ref[0],
                            preferred_element_type=jnp.float32)

    @pl.when(pos == pl.num_programs(1) - 1)
    def _():
        hid = jnp.maximum(acc_ref[...] + bfc_ref[...], 0.0)
        q = jnp.dot(hid.astype(wout_ref.dtype), wout_ref[...],
                    preferred_element_type=jnp.float32)
        o_ref[...] = (q + bout_ref[...]).astype(o_ref.dtype)


def pallas_conv3_fc_head(patches, w3, b3, wfc, bfc, wout, bout,
                         *, max_tm=TM_DEFAULT):
    """patches: (P, B, Kp) bf16, w3: (Kp, 64) bf16, wfc: (P, 64, 512) bf16,
    wout: (512, APAD) bf16 -> (B, APAD) f32."""
    npos, batch, kp = patches.shape
    kp2, c3 = w3.shape
    npos2, c32, hidden = wfc.shape
    hidden2, apad = wout.shape
    assert kp == kp2 and c3 == c32 and npos == npos2 and hidden == hidden2
    assert b3.shape == (1, c3) and bfc.shape == (1, hidden)
    assert bout.shape == (1, apad)
    tm = _choose_tm(batch, max_tm)
    return pl.pallas_call(
        _conv3_fc_head_kernel,
        out_shape=jax.ShapeDtypeStruct((batch, apad), jnp.float32),
        grid=(pl.cdiv(batch, tm), npos),
        in_specs=[
            pl.BlockSpec((1, tm, kp), lambda i, p: (p, i, 0)),
            pl.BlockSpec((kp, c3), lambda i, p: (0, 0)),
            pl.BlockSpec((1, c3), lambda i, p: (0, 0)),
            pl.BlockSpec((1, c3, hidden), lambda i, p: (p, 0, 0)),
            pl.BlockSpec((1, hidden), lambda i, p: (0, 0)),
            pl.BlockSpec((hidden, apad), lambda i, p: (0, 0)),
            pl.BlockSpec((1, apad), lambda i, p: (0, 0)),
        ],
        out_specs=pl.BlockSpec((tm, apad), lambda i, p: (i, 0)),
        scratch_shapes=[pltpu.VMEM((tm, hidden), jnp.float32)],
        compiler_params=_compiler_params(("parallel", "arbitrary")),
    )(patches, w3, b3, wfc, bfc, wout, bout)


# ----------------------------------------------------------------------------
# Glue: im2col patch extraction (data rearrangement only, bf16, true channels).
# Patch feature ordering is (kh, kw, cin); weights are reordered to match.
# ----------------------------------------------------------------------------
def _im2col_taps(x_nhwc, kh, kw, stride):
    n, h, w, c = x_nhwc.shape
    oh = (h - kh) // stride + 1
    ow = (w - kw) // stride + 1
    cols = []
    for i in range(kh):
        for j in range(kw):
            patch = lax.slice(
                x_nhwc,
                (0, i, j, 0),
                (n, i + stride * (oh - 1) + 1, j + stride * (ow - 1) + 1, c),
                (1, stride, stride, 1),
            )                                    # (n, oh, ow, c)
            cols.append(patch)
    return jnp.stack(cols, axis=3), oh, ow       # (n, oh, ow, kh*kw, c)


def _im2col_rows(x_nhwc, kh, kw, stride):
    """Row-major im2col: (n*oh*ow, kh*kw*c)."""
    taps, oh, ow = _im2col_taps(x_nhwc, kh, kw, stride)
    n = x_nhwc.shape[0]
    kkc = taps.shape[3] * taps.shape[4]
    return taps.reshape(n * oh * ow, kkc), oh, ow


def _im2col_pos_major(x_nhwc, kh, kw, stride):
    """Position-major im2col: (oh*ow, n, kh*kw*c) — feeds the fused head."""
    taps, oh, ow = _im2col_taps(x_nhwc, kh, kw, stride)
    n = x_nhwc.shape[0]
    kkc = taps.shape[3] * taps.shape[4]
    taps = taps.reshape(n, oh * ow, kkc)
    return jnp.transpose(taps, (1, 0, 2)), oh, ow


def conv2d_relu(x_nhwc, w2d, b, *, kh, kw, stride):
    """PyTorch-semantics Conv2d (no padding) + ReLU with true output channels."""
    cols, oh, ow = _im2col_rows(x_nhwc, kh, kw, stride)
    y = pallas_matmul_bias_relu(cols, w2d, b, relu=True, out_dtype=jnp.bfloat16)
    return y.reshape(x_nhwc.shape[0], oh, ow, w2d.shape[1])


# ----------------------------------------------------------------------------
# DQN parameters (torch layout) + one-time prep into kernel-friendly layout.
# ----------------------------------------------------------------------------
def _conv_out(size, k, s):
    return (size - k) // s + 1


def feature_dims(input_shape):
    _, h, w = input_shape
    h1, w1 = _conv_out(h, 8, 4), _conv_out(w, 8, 4)
    h2, w2 = _conv_out(h1, 4, 2), _conv_out(w1, 4, 2)
    h3, w3 = _conv_out(h2, 3, 1), _conv_out(w2, 3, 1)
    return h3, w3


def init_dqn_params(key, input_shape, num_actions):
    c_in = input_shape[0]
    h3, w3 = feature_dims(input_shape)
    feat = 64 * h3 * w3
    keys = jax.random.split(key, 10)

    def u(k, shape, fan_in):
        bound = 1.0 / jnp.sqrt(fan_in)
        return jax.random.uniform(k, shape, jnp.float32, -bound, bound)

    return {
        "w1": u(keys[0], (32, c_in, 8, 8), c_in * 8 * 8),
        "b1": u(keys[1], (32,), c_in * 8 * 8),
        "w2": u(keys[2], (64, 32, 4, 4), 32 * 4 * 4),
        "b2": u(keys[3], (64,), 32 * 4 * 4),
        "w3": u(keys[4], (64, 64, 3, 3), 64 * 3 * 3),
        "b3": u(keys[5], (64,), 64 * 3 * 3),
        "wfc": u(keys[6], (512, feat), feat),
        "bfc": u(keys[7], (512,), feat),
        "wout": u(keys[8], (num_actions, 512), 512),
        "bout": u(keys[9], (num_actions,), 512),
    }


def prepare_params(params, input_shape, num_actions):
    """One-time reorder/cast of torch-layout params into kernel layout."""
    h3, w3 = feature_dims(input_shape)

    def conv_w(w_ocik):
        cout, cin, kh, kw = w_ocik.shape
        # (Cout, Cin, KH, KW) -> (KH, KW, Cin, Cout) -> (KH*KW*Cin, Cout)
        return (jnp.transpose(w_ocik, (2, 3, 1, 0))
                .reshape(kh * kw * cin, cout).astype(jnp.bfloat16))

    def row_bias(bias):
        return bias.reshape(1, -1).astype(jnp.float32)

    # fc weight: torch flatten order (c, h, w) -> position-major (h*w, 64, 512)
    # so each fused-head step contracts exactly the 64 real channels of one
    # conv3 spatial position (no interleaved zero rows, no tail padding).
    wfc = params["wfc"].reshape(512, 64, h3, w3)
    wfc = jnp.transpose(wfc, (2, 3, 1, 0)).reshape(h3 * w3, 64, 512)

    wout = jnp.pad(params["wout"].T, ((0, 0), (0, APAD - num_actions)))
    bout = jnp.pad(params["bout"], (0, APAD - num_actions))

    return {
        "w1": conv_w(params["w1"]), "b1": row_bias(params["b1"]),
        "w2": conv_w(params["w2"]), "b2": row_bias(params["b2"]),
        "w3": conv_w(params["w3"]), "b3": row_bias(params["b3"]),
        "wfc": wfc.astype(jnp.bfloat16),
        "bfc": row_bias(params["bfc"]),
        "wout": wout.astype(jnp.bfloat16),
        "bout": bout.reshape(1, APAD).astype(jnp.float32),
    }


# ----------------------------------------------------------------------------
# DQN forward (Pallas) and a pure-JAX f32 reference for validation.
# ----------------------------------------------------------------------------
def dqn_forward(prep, x_nchw, *, num_actions):
    # NCHW -> NHWC; bf16 MXU inputs (f32 accumulation + f32 epilogues inside).
    x = jnp.transpose(x_nchw, (0, 2, 3, 1)).astype(jnp.bfloat16)
    y = conv2d_relu(x, prep["w1"], prep["b1"], kh=8, kw=8, stride=4)   # (n,h1,w1,32)
    y = conv2d_relu(y, prep["w2"], prep["b2"], kh=4, kw=4, stride=2)   # (n,h2,w2,64)
    patches3, _, _ = _im2col_pos_major(y, 3, 3, 1)                     # (h3*w3,n,576)
    q_pad = pallas_conv3_fc_head(patches3, prep["w3"], prep["b3"],
                                 prep["wfc"], prep["bfc"],
                                 prep["wout"], prep["bout"])
    return q_pad[:, :num_actions]


def dqn_reference(params, x_nchw):
    def conv(x, w, b, stride):
        y = lax.conv_general_dilated(
            x, w, (stride, stride), "VALID",
            dimension_numbers=("NCHW", "OIHW", "NCHW"))
        return jax.nn.relu(y + b[None, :, None, None])
    x = conv(x_nchw.astype(jnp.float32), params["w1"], params["b1"], 4)
    x = conv(x, params["w2"], params["b2"], 2)
    x = conv(x, params["w3"], params["b3"], 1)
    x = x.reshape(x.shape[0], -1)
    h = jax.nn.relu(x @ params["wfc"].T + params["bfc"])
    return h @ params["wout"].T + params["bout"]


if __name__ == "__main__":
    # Smallest spatial size valid for the conv stack: (C=4, H=36, W=36)
    #   conv1: 36 -> 8, conv2: 8 -> 3, conv3: 3 -> 1  => feature = 64
    input_shape = (4, 36, 36)
    num_actions = 6
    batch = 2

    key = jax.random.PRNGKey(0)
    k_params, k_x = jax.random.split(key)
    params = init_dqn_params(k_params, input_shape, num_actions)
    prep = prepare_params(params, input_shape, num_actions)   # one-time layout prep
    x = jax.random.normal(k_x, (batch,) + input_shape, dtype=jnp.float32)

    fwd = jax.jit(functools.partial(dqn_forward, num_actions=num_actions))
    q_values = fwd(prep, x)
    jax.block_until_ready(q_values)

    assert q_values.shape == (batch, num_actions)
    assert q_values.dtype == jnp.float32

    q_ref = dqn_reference(params, x)
    max_err = float(jnp.max(jnp.abs(q_values - q_ref)))
    assert max_err < 0.15, f"mismatch vs f32 reference: {max_err}"

    print("KERNEL_OK")
</pallas_src>

<mosaic_0001>
module attributes {stable_mosaic.version = 11 : i64} {
  func.func @_matmul_bias_relu_kernel(%arg0: i32, %arg1: memref<128x256xbf16, #tpu.memory_space<vmem>>, %arg2: memref<256x32xbf16, #tpu.memory_space<vmem>>, %arg3: memref<1x32xf32, #tpu.memory_space<vmem>>, %arg4: memref<128x32xbf16, #tpu.memory_space<vmem>>) attributes {dimension_semantics = [#tpu.dimension_semantics<parallel>], iteration_bounds = array<i64: 1>, scalar_prefetch = 0 : i64, scratch_operands = 0 : i64, tpu.core_type = #tpu.core_type<tc>, window_params = [{transform_indices = @transform_0, window_bounds = array<i64: 128, 256>}, {pipeline_mode = #tpu.pipeline_mode<synchronous>, transform_indices = @transform_1, window_bounds = array<i64: 256, 32>}, {pipeline_mode = #tpu.pipeline_mode<synchronous>, transform_indices = @transform_2, window_bounds = array<i64: 1, 32>}, {transform_indices = @transform_3, window_bounds = array<i64: 128, 32>}]} {
    %c0 = arith.constant 0 : index
    %c0_0 = arith.constant 0 : index
    %0 = vector.load %arg1[%c0, %c0_0] : memref<128x256xbf16, #tpu.memory_space<vmem>>, vector<128x256xbf16>
    %c0_1 = arith.constant 0 : index
    %c0_2 = arith.constant 0 : index
    %1 = vector.load %arg2[%c0_1, %c0_2] : memref<256x32xbf16, #tpu.memory_space<vmem>>, vector<256x32xbf16>
    %cst = arith.constant dense<0.000000e+00> : vector<128x32xf32>
    %2 = tpu.matmul %0, %1, %cst {dimension_numbers = #tpu.dot_dimension_numbers<[1], [0], [0], [1], [0, 0, 1, 1], [], []>} : vector<128x256xbf16>, vector<256x32xbf16>, vector<128x32xf32> -> vector<128x32xf32>
    %c0_3 = arith.constant 0 : index
    %c0_4 = arith.constant 0 : index
    %3 = vector.load %arg3[%c0_3, %c0_4] : memref<1x32xf32, #tpu.memory_space<vmem>>, vector<1x32xf32>
    %4 = vector.broadcast %3 : vector<1x32xf32> to vector<128x32xf32>
    %5 = arith.addf %2, %4 : vector<128x32xf32>
    %cst_5 = arith.constant 0.000000e+00 : f32
    %6 = vector.broadcast %cst_5 : f32 to vector<128x32xf32>
    %7 = arith.maximumf %5, %6 : vector<128x32xf32>
    %8 = arith.truncf %7 : vector<128x32xf32> to vector<128x32xbf16>
    %c0_6 = arith.constant 0 : index
    %c0_7 = arith.constant 0 : index
    %9 = vector.load %arg4[%c0_6, %c0_7] : memref<128x32xbf16, #tpu.memory_space<vmem>>, vector<128x32xbf16>
    tpu.vector_store %arg4[%c0_6, %c0_7], %8 {strides = array<i32>} : memref<128x32xbf16, #tpu.memory_space<vmem>>, vector<128x32xbf16>,
    return
  }
  func.func @transform_0(%arg0: i32) -> (i32, i32) {
    %c0_i32 = arith.constant 0 : i32
    %c0_i32_0 = arith.constant 0 : i32
    return %arg0, %c0_i32 : i32, i32
  }
  func.func @transform_1(%arg0: i32) -> (i32, i32) {
    %c0_i32 = arith.constant 0 : i32
    %c0_i32_0 = arith.constant 0 : i32
    %c0_i32_1 = arith.constant 0 : i32
    return %c0_i32, %c0_i32_0 : i32, i32
  }
  func.func @transform_2(%arg0: i32) -> (i32, i32) {
    %c0_i32 = arith.constant 0 : i32
    %c0_i32_0 = arith.constant 0 : i32
    %c0_i32_1 = arith.constant 0 : i32
    return %c0_i32, %c0_i32_0 : i32, i32
  }
  func.func @transform_3(%arg0: i32) -> (i32, i32) {
    %c0_i32 = arith.constant 0 : i32
    %c0_i32_0 = arith.constant 0 : i32
    return %arg0, %c0_i32 : i32, i32
  }
}

module attributes {stable_mosaic.version = 11 : i64} {
  func.func @_matmul_bias_relu_kernel(%arg0: i32, %arg1: memref<18x512xbf16, #tpu.memory_space<vmem>>, %arg2: memref<512x64xbf16, #tpu.memory_space<vmem>>, %arg3: memref<1x64xf32, #tpu.memory_space<vmem>>, %arg4: memref<18x64xbf16, #tpu.memory_space<vmem>>) attributes {dimension_semantics = [#tpu.dimension_semantics<parallel>], iteration_bounds = array<i64: 1>, scalar_prefetch = 0 : i64, scratch_operands = 0 : i64, tpu.core_type = #tpu.core_type<tc>, window_params = [{transform_indices = @transform_0, window_bounds = array<i64: 18, 512>}, {pipeline_mode = #tpu.pipeline_mode<synchronous>, transform_indices = @transform_1, window_bounds = array<i64: 512, 64>}, {pipeline_mode = #tpu.pipeline_mode<synchronous>, transform_indices = @transform_2, window_bounds = array<i64: 1, 64>}, {transform_indices = @transform_3, window_bounds = array<i64: 18, 64>}]} {
    %c0 = arith.constant 0 : index
    %c0_0 = arith.constant 0 : index
    %0 = vector.load %arg1[%c0, %c0_0] : memref<18x512xbf16, #tpu.memory_space<vmem>>, vector<18x512xbf16>
    %c0_1 = arith.constant 0 : index
    %c0_2 = arith.constant 0 : index
    %1 = vector.load %arg2[%c0_1, %c0_2] : memref<512x64xbf16, #tpu.memory_space<vmem>>, vector<512x64xbf16>
    %cst = arith.constant dense<0.000000e+00> : vector<18x64xf32>
    %2 = tpu.matmul %0, %1, %cst {dimension_numbers = #tpu.dot_dimension_numbers<[1], [0], [0], [1], [0, 0, 1, 1], [], []>} : vector<18x512xbf16>, vector<512x64xbf16>, vector<18x64xf32> -> vector<18x64xf32>
    %c0_3 = arith.constant 0 : index
    %c0_4 = arith.constant 0 : index
    %3 = vector.load %arg3[%c0_3, %c0_4] : memref<1x64xf32, #tpu.memory_space<vmem>>, vector<1x64xf32>
    %4 = vector.broadcast %3 : vector<1x64xf32> to vector<18x64xf32>
    %5 = arith.addf %2, %4 : vector<18x64xf32>
    %cst_5 = arith.constant 0.000000e+00 : f32
    %6 = vector.broadcast %cst_5 : f32 to vector<18x64xf32>
    %7 = arith.maximumf %5, %6 : vector<18x64xf32>
    %8 = arith.truncf %7 : vector<18x64xf32> to vector<18x64xbf16>
    %c0_6 = arith.constant 0 : index
    %c0_7 = arith.constant 0 : index
    %9 = vector.load %arg4[%c0_6, %c0_7] : memref<18x64xbf16, #tpu.memory_space<vmem>>, vector<18x64xbf16>
    tpu.vector_store %arg4[%c0_6, %c0_7], %8 {strides = array<i32>} : memref<18x64xbf16, #tpu.memory_space<vmem>>, vector<18x64xbf16>,
    return
  }
  func.func @transform_0(%arg0: i32) -> (i32, i32) {
    %c0_i32 = arith.constant 0 : i32
    %c0_i32_0 = arith.constant 0 : i32
    return %arg0, %c0_i32 : i32, i32
  }
  func.func @transform_1(%arg0: i32) -> (i32, i32) {
    %c0_i32 = arith.constant 0 : i32
    %c0_i32_0 = arith.constant 0 : i32
    %c0_i32_1 = arith.constant 0 : i32
    return %c0_i32, %c0_i32_0 : i32, i32
  }
  func.func @transform_2(%arg0: i32) -> (i32, i32) {
    %c0_i32 = arith.constant 0 : i32
    %c0_i32_0 = arith.constant 0 : i32
    %c0_i32_1 = arith.constant 0 : i32
    return %c0_i32, %c0_i32_0 : i32, i32
  }
  func.func @transform_3(%arg0: i32) -> (i32, i32) {
    %c0_i32 = arith.constant 0 : i32
    %c0_i32_0 = arith.constant 0 : i32
    return %arg0, %c0_i32 : i32, i32
  }
}

module attributes {stable_mosaic.version = 11 : i64} {
  func.func @_conv3_fc_head_kernel(%arg0: i32, %arg1: i32, %arg2: memref<1x2x576xbf16, #tpu.memory_space<vmem>>, %arg3: memref<576x64xbf16, #tpu.memory_space<vmem>>, %arg4: memref<1x64xf32, #tpu.memory_space<vmem>>, %arg5: memref<1x64x512xbf16, #tpu.memory_space<vmem>>, %arg6: memref<1x512xf32, #tpu.memory_space<vmem>>, %arg7: memref<512x128xbf16, #tpu.memory_space<vmem>>, %arg8: memref<1x128xf32, #tpu.memory_space<vmem>>, %arg9: memref<2x128xf32, #tpu.memory_space<vmem>>, %arg10: memref<2x512xf32, #tpu.memory_space<vmem>>) attributes {dimension_semantics = [#tpu.dimension_semantics<parallel>, #tpu.dimension_semantics<arbitrary>], iteration_bounds = array<i64: 1, 1>, scalar_prefetch = 0 : i64, scratch_operands = 1 : i64, tpu.core_type = #tpu.core_type<tc>, window_params = [{transform_indices = @transform_0, window_bounds = array<i64: 1, 2, 576>}, {pipeline_mode = #tpu.pipeline_mode<synchronous>, transform_indices = @transform_1, window_bounds = array<i64: 576, 64>}, {pipeline_mode = #tpu.pipeline_mode<synchronous>, transform_indices = @transform_2, window_bounds = array<i64: 1, 64>}, {transform_indices = @transform_3, window_bounds = array<i64: 1, 64, 512>}, {pipeline_mode = #tpu.pipeline_mode<synchronous>, transform_indices = @transform_4, window_bounds = array<i64: 1, 512>}, {pipeline_mode = #tpu.pipeline_mode<synchronous>, transform_indices = @transform_5, window_bounds = array<i64: 512, 128>}, {pipeline_mode = #tpu.pipeline_mode<synchronous>, transform_indices = @transform_6, window_bounds = array<i64: 1, 128>}, {transform_indices = @transform_7, window_bounds = array<i64: 2, 128>}]} {
    %c0_i32 = arith.constant 0 : i32
    %0 = arith.cmpi eq, %arg1, %c0_i32 : i32
    %1 = arith.extui %0 : i1 to i32
    %c0_i32_0 = arith.constant 0 : i32
    %2 = arith.cmpi ne, %1, %c0_i32_0 : i32
    scf.if %2 {
      %cst_18 = arith.constant 0.000000e+00 : f32
      %22 = vector.broadcast %cst_18 : f32 to vector<2x512xf32>
      %c0_19 = arith.constant 0 : index
      %c0_20 = arith.constant 0 : index
      %23 = vector.load %arg10[%c0_19, %c0_20] : memref<2x512xf32, #tpu.memory_space<vmem>>, vector<2x512xf32>
      tpu.vector_store %arg10[%c0_19, %c0_20], %22 {strides = array<i32>} : memref<2x512xf32, #tpu.memory_space<vmem>>, vector<2x512xf32>,
    } else {
    }
    %c0 = arith.constant 0 : index
    %c0_1 = arith.constant 0 : index
    %c0_2 = arith.constant 0 : index
    %3 = vector.load %arg2[%c0, %c0_1, %c0_2] : memref<1x2x576xbf16, #tpu.memory_space<vmem>>, vector<1x2x576xbf16>
    %4 = vector.shape_cast %3 : vector<1x2x576xbf16> to vector<2x576xbf16>
    %c0_3 = arith.constant 0 : index
    %c0_4 = arith.constant 0 : index
    %5 = vector.load %arg3[%c0_3, %c0_4] : memref<576x64xbf16, #tpu.memory_space<vmem>>, vector<576x64xbf16>
    %cst = arith.constant dense<0.000000e+00> : vector<2x64xf32>
    %6 = tpu.matmul %4, %5, %cst {dimension_numbers = #tpu.dot_dimension_numbers<[1], [0], [0], [1], [0, 0, 1, 1], [], []>} : vector<2x576xbf16>, vector<576x64xbf16>, vector<2x64xf32> -> vector<2x64xf32>
    %c0_5 = arith.constant 0 : index
    %c0_6 = arith.constant 0 : index
    %7 = vector.load %arg4[%c0_5, %c0_6] : memref<1x64xf32, #tpu.memory_space<vmem>>, vector<1x64xf32>
    %8 = vector.broadcast %7 : vector<1x64xf32> to vector<2x64xf32>
    %9 = arith.addf %6, %8 : vector<2x64xf32>
    %cst_7 = arith.constant 0.000000e+00 : f32
    %10 = vector.broadcast %cst_7 : f32 to vector<2x64xf32>
    %11 = arith.maximumf %9, %10 : vector<2x64xf32>
    %c0_8 = arith.constant 0 : index
    %c0_9 = arith.constant 0 : index
    %12 = vector.load %arg10[%c0_8, %c0_9] : memref<2x512xf32, #tpu.memory_space<vmem>>, vector<2x512xf32>
    %13 = arith.truncf %11 : vector<2x64xf32> to vector<2x64xbf16>
    %c0_10 = arith.constant 0 : index
    %c0_11 = arith.constant 0 : index
    %c0_12 = arith.constant 0 : index
    %14 = vector.load %arg5[%c0_10, %c0_11, %c0_12] : memref<1x64x512xbf16, #tpu.memory_space<vmem>>, vector<1x64x512xbf16>
    %15 = vector.shape_cast %14 : vector<1x64x512xbf16> to vector<64x512xbf16>
    %cst_13 = arith.constant dense<0.000000e+00> : vector<2x512xf32>
    %16 = tpu.matmul %13, %15, %cst_13 {dimension_numbers = #tpu.dot_dimension_numbers<[1], [0], [0], [1], [0, 0, 1, 1], [], []>} : vector<2x64xbf16>, vector<64x512xbf16>, vector<2x512xf32> -> vector<2x512xf32>
    %17 = arith.addf %12, %16 : vector<2x512xf32>
    %c0_14 = arith.constant 0 : index
    %c0_15 = arith.constant 0 : index
    %18 = vector.load %arg10[%c0_14, %c0_15] : memref<2x512xf32, #tpu.memory_space<vmem>>, vector<2x512xf32>
    tpu.vector_store %arg10[%c0_14, %c0_15], %17 {strides = array<i32>} : memref<2x512xf32, #tpu.memory_space<vmem>>, vector<2x512xf32>,
    %c0_i32_16 = arith.constant 0 : i32
    %19 = arith.cmpi eq, %arg1, %c0_i32_16 : i32
    %20 = arith.extui %19 : i1 to i32
    %c0_i32_17 = arith.constant 0 : i32
    %21 = arith.cmpi ne, %20, %c0_i32_17 : i32
    scf.if %21 {
      %c0_18 = arith.constant 0 : index
      %c0_19 = arith.constant 0 : index
      %22 = vector.load %arg10[%c0_18, %c0_19] : memref<2x512xf32, #tpu.memory_space<vmem>>, vector<2x512xf32>
      %c0_20 = arith.constant 0 : index
      %c0_21 = arith.constant 0 : index
      %23 = vector.load %arg6[%c0_20, %c0_21] : memref<1x512xf32, #tpu.memory_space<vmem>>, vector<1x512xf32>
      %24 = vector.broadcast %23 : vector<1x512xf32> to vector<2x512xf32>
      %25 = arith.addf %22, %24 : vector<2x512xf32>
      %cst_22 = arith.constant 0.000000e+00 : f32
      %26 = vector.broadcast %cst_22 : f32 to vector<2x512xf32>
      %27 = arith.maximumf %25, %26 : vector<2x512xf32>
      %28 = arith.truncf %27 : vector<2x512xf32> to vector<2x512xbf16>
      %c0_23 = arith.constant 0 : index
      %c0_24 = arith.constant 0 : index
      %29 = vector.load %arg7[%c0_23, %c0_24] : memref<512x128xbf16, #tpu.memory_space<vmem>>, vector<512x128xbf16>
      %cst_25 = arith.constant dense<0.000000e+00> : vector<2x128xf32>
      %30 = tpu.matmul %28, %29, %cst_25 {dimension_numbers = #tpu.dot_dimension_numbers<[1], [0], [0], [1], [0, 0, 1, 1], [], []>} : vector<2x512xbf16>, vector<512x128xbf16>, vector<2x128xf32> -> vector<2x128xf32>
      %c0_26 = arith.constant 0 : index
      %c0_27 = arith.constant 0 : index
      %31 = vector.load %arg8[%c0_26, %c0_27] : memref<1x128xf32, #tpu.memory_space<vmem>>, vector<1x128xf32>
      %32 = vector.broadcast %31 : vector<1x128xf32> to vector<2x128xf32>
      %33 = arith.addf %30, %32 : vector<2x128xf32>
      %c0_28 = arith.constant 0 : index
      %c0_29 = arith.constant 0 : index
      %34 = vector.load %arg9[%c0_28, %c0_29] : memref<2x128xf32, #tpu.memory_space<vmem>>, vector<2x128xf32>
      tpu.vector_store %arg9[%c0_28, %c0_29], %33 {strides = array<i32>} : memref<2x128xf32, #tpu.memory_space<vmem>>, vector<2x128xf32>,
    } else {
    }
    return
  }
  func.func @transform_0(%arg0: i32, %arg1: i32) -> (i32, i32, i32) {
    %c0_i32 = arith.constant 0 : i32
    %c0_i32_0 = arith.constant 0 : i32
    return %arg1, %arg0, %c0_i32 : i32, i32, i32
  }
  func.func @transform_1(%arg0: i32, %arg1: i32) -> (i32, i32) {
    %c0_i32 = arith.constant 0 : i32
    %c0_i32_0 = arith.constant 0 : i32
    %c0_i32_1 = arith.constant 0 : i32
    return %c0_i32, %c0_i32_0 : i32, i32
  }
  func.func @transform_2(%arg0: i32, %arg1: i32) -> (i32, i32) {
    %c0_i32 = arith.constant 0 : i32
    %c0_i32_0 = arith.constant 0 : i32
    %c0_i32_1 = arith.constant 0 : i32
    return %c0_i32, %c0_i32_0 : i32, i32
  }
  func.func @transform_3(%arg0: i32, %arg1: i32) -> (i32, i32, i32) {
    %c0_i32 = arith.constant 0 : i32
    %c0_i32_0 = arith.constant 0 : i32
    %c0_i32_1 = arith.constant 0 : i32
    return %arg1, %c0_i32, %c0_i32_0 : i32, i32, i32
  }
  func.func @transform_4(%arg0: i32, %arg1: i32) -> (i32, i32) {
    %c0_i32 = arith.constant 0 : i32
    %c0_i32_0 = arith.constant 0 : i32
    %c0_i32_1 = arith.constant 0 : i32
    return %c0_i32, %c0_i32_0 : i32, i32
  }
  func.func @transform_5(%arg0: i32, %arg1: i32) -> (i32, i32) {
    %c0_i32 = arith.constant 0 : i32
    %c0_i32_0 = arith.constant 0 : i32
    %c0_i32_1 = arith.constant 0 : i32
    return %c0_i32, %c0_i32_0 : i32, i32
  }
  func.func @transform_6(%arg0: i32, %arg1: i32) -> (i32, i32) {
    %c0_i32 = arith.constant 0 : i32
    %c0_i32_0 = arith.constant 0 : i32
    %c0_i32_1 = arith.constant 0 : i32
    return %c0_i32, %c0_i32_0 : i32, i32
  }
  func.func @transform_7(%arg0: i32, %arg1: i32) -> (i32, i32) {
    %c0_i32 = arith.constant 0 : i32
    %c0_i32_0 = arith.constant 0 : i32
    return %arg0, %c0_i32 : i32, i32
  }
}

</mosaic_0001>

<llo_original>
// kernel: dqn_forward.3
$region0: #{dqn_forward.3}
  #allocation0 [shape = 'u32[]', space=smem, size = 0x4, offset = 0x4, fixed_abs, tag = 'smem constant byte address 0x4 - core index']
  #allocation1 [shape = 'u32[144,128]{1,0:T(1,128)}', space=vmem, size = 0x12000, scoped, tag = 'internal scratch']
  %s0 = inlined_call_operand.vmem [shape: bf16[128,256], index: 0, kind: input, shape index: {}]
  %s1 = inlined_call_operand.vmem [shape: bf16[256,32], index: 1, kind: input, shape index: {}]
  %s2 = inlined_call_operand.vmem [shape: f32[1,32], index: 2, kind: input, shape index: {}]
  %s3 = inlined_call_operand.vmem [shape: bf16[128,32], index: 3, kind: output, shape index: {}]
  %s4 = sld [smem:[#allocation0]]
  $region22: #{dqn_forward.3} parent=0
    _
  %s6 = ssub.s32 1, %s4
  %s7 = scalar_select 0, %s6, %s4
  // Predicated region
  $region2: #{dqn_forward.3} parent=0 // pred_check
    _
  $region3: #{dqn_forward.3} parent=0 // pred_check_branch
    %9 = sbr.rel (0) target = $region5
  $region4: #{dqn_forward.3} parent=0 // pred_region
    _
  $region5: #{dqn_forward.3} parent=0 // pred_fallthru
    _
  // Predicated region
  $region6: #{dqn_forward.3} parent=0 // pred_check
    _
  $region7: #{dqn_forward.3} parent=0 // pred_check_branch
    %11 = sbr.rel (0) target = $region9
  $region8: #{dqn_forward.3} parent=0 // pred_region
    _
  $region9: #{dqn_forward.3} parent=0 // pred_fallthru
    _
  // Predicated region
  $region10: #{dqn_forward.3} parent=0 // pred_check
    _
  $region11: #{dqn_forward.3} parent=0 // pred_check_branch
    %13 = sbr.rel (0) target = $region13
  $region12: #{dqn_forward.3} parent=0 // pred_region
    _
  $region13: #{dqn_forward.3} parent=0 // pred_fallthru
    _
  %v15 = vld [vmem:[%s0] sm:$0xff]
  %v16 = vld [vmem:[%s0 + $0x8] sm:$0xff]
  %v17 = vld [vmem:[%s0 + $0x10] sm:$0xff]
  %v18 = vld [vmem:[%s0 + $0x18] sm:$0xff]
  %v19 = vld [vmem:[%s0 + $0x20] sm:$0xff]
  %v20 = vld [vmem:[%s0 + $0x28] sm:$0xff]
  %v21 = vld [vmem:[%s0 + $0x30] sm:$0xff]
  %v22 = vld [vmem:[%s0 + $0x38] sm:$0xff]
  %v23 = vld [vmem:[%s0 + $0x40] sm:$0xff]
  %v24 = vld [vmem:[%s0 + $0x48] sm:$0xff]
  %v25 = vld [vmem:[%s0 + $0x50] sm:$0xff]
  %v26 = vld [vmem:[%s0 + $0x58] sm:$0xff]
  %v27 = vld [vmem:[%s0 + $0x60] sm:$0xff]
  %v28 = vld [vmem:[%s0 + $0x68] sm:$0xff]
  %v29 = vld [vmem:[%s0 + $0x70] sm:$0xff]
  %v30 = vld [vmem:[%s0 + $0x78] sm:$0xff]
  %v31 = vld [vmem:[%s1] sm:$0xf]
  %v32 = vld [vmem:[%s1 + $0x4] sm:$0xf]
  %v33 = vld [vmem:[%s1 + $0x8] sm:$0xf]
  %v34 = vld [vmem:[%s1 + $0xc] sm:$0xf]
  %v35 = vld [vmem:[%s1 + $0x10] sm:$0xf]
  %v36 = vld [vmem:[%s1 + $0x14] sm:$0xf]
  %v37 = vld [vmem:[%s1 + $0x18] sm:$0xf]
  %v38 = vld [vmem:[%s1 + $0x1c] sm:$0xf]
  %v39 = vld [vmem:[%s1 + $0x20] sm:$0xf]
  %v40 = vld [vmem:[%s1 + $0x24] sm:$0xf]
  %v41 = vld [vmem:[%s1 + $0x28] sm:$0xf]
  %v42 = vld [vmem:[%s1 + $0x2c] sm:$0xf]
  %v43 = vld [vmem:[%s1 + $0x30] sm:$0xf]
  %v44 = vld [vmem:[%s1 + $0x34] sm:$0xf]
  %v45 = vld [vmem:[%s1 + $0x38] sm:$0xf]
  %v46 = vld [vmem:[%s1 + $0x3c] sm:$0xf]
  %v47 = vld [vmem:[%s1 + $0x40] sm:$0xf]
  %v48 = vld [vmem:[%s1 + $0x44] sm:$0xf]
  %v49 = vld [vmem:[%s1 + $0x48] sm:$0xf]
  %v50 = vld [vmem:[%s1 + $0x4c] sm:$0xf]
  %v51 = vld [vmem:[%s1 + $0x50] sm:$0xf]
  %v52 = vld [vmem:[%s1 + $0x54] sm:$0xf]
  %v53 = vld [vmem:[%s1 + $0x58] sm:$0xf]
  %v54 = vld [vmem:[%s1 + $0x5c] sm:$0xf]
  %v55 = vld [vmem:[%s1 + $0x60] sm:$0xf]
  %v56 = vld [vmem:[%s1 + $0x64] sm:$0xf]
  %v57 = vld [vmem:[%s1 + $0x68] sm:$0xf]
  %v58 = vld [vmem:[%s1 + $0x6c] sm:$0xf]
  %v59 = vld [vmem:[%s1 + $0x70] sm:$0xf]
  %v60 = vld [vmem:[%s1 + $0x74] sm:$0xf]
  %v61 = vld [vmem:[%s1 + $0x78] sm:$0xf]
  %v62 = vld [vmem:[%s1 + $0x7c] sm:$0xf]
  %v63 = vld [vmem:[%s2] sm:$0x1]
  %v65 = vlaneseq
  %v66 = vshrl.u32 %v65, 7
  %v67 = vsub.s32 0, %v66
  %v68 = vrot.slane %v63, %v67
  %v86 = vunpack.c.l.b16 %v15
  %v87 = vunpack.c.h.b16 %v15
  %v88 = vunpack.c.l.b16 %v16
  %v89 = vunpack.c.h.b16 %v16
  %v90 = vunpack.c.l.b16 %v17
  %v91 = vunpack.c.h.b16 %v17
  %v92 = vunpack.c.l.b16 %v18
  %v93 = vunpack.c.h.b16 %v18
  %v94 = vunpack.c.l.b16 %v19
  %v95 = vunpack.c.h.b16 %v19
  %v96 = vunpack.c.l.b16 %v20
  %v97 = vunpack.c.h.b16 %v20
  %v98 = vunpack.c.l.b16 %v21
  %v99 = vunpack.c.h.b16 %v21
  %v100 = vunpack.c.l.b16 %v22
  %v101 = vunpack.c.h.b16 %v22
  %v102 = vunpack.c.l.b16 %v23
  %v103 = vunpack.c.h.b16 %v23
  %v104 = vunpack.c.l.b16 %v24
  %v105 = vunpack.c.h.b16 %v24
  %v106 = vunpack.c.l.b16 %v25
  %v107 = vunpack.c.h.b16 %v25
  %v108 = vunpack.c.l.b16 %v26
  %v109 = vunpack.c.h.b16 %v26
  %v110 = vunpack.c.l.b16 %v27
  %v111 = vunpack.c.h.b16 %v27
  %v112 = vunpack.c.l.b16 %v28
  %v113 = vunpack.c.h.b16 %v28
  %v114 = vunpack.c.l.b16 %v29
  %v115 = vunpack.c.h.b16 %v29
  %v116 = vunpack.c.l.b16 %v30
  %v117 = vunpack.c.h.b16 %v30
  %v118 = vpack.c.b16 %v88, %v86
  %v119 = vpack.c.b16 %v89, %v87
  %v120 = vpack.c.b16 %v92, %v90
  %v121 = vpack.c.b16 %v93, %v91
  %v122 = vpack.c.b16 %v96, %v94
  %v123 = vpack.c.b16 %v97, %v95
  %v124 = vpack.c.b16 %v100, %v98
  %v125 = vpack.c.b16 %v101, %v99
  %v126 = vpack.c.b16 %v104, %v102
  %v127 = vpack.c.b16 %v105, %v103
  %v128 = vpack.c.b16 %v108, %v106
  %v129 = vpack.c.b16 %v109, %v107
  %v130 = vpack.c.b16 %v112, %v110
  %v131 = vpack.c.b16 %v113, %v111
  %v132 = vpack.c.b16 %v116, %v114
  %v133 = vpack.c.b16 %v117, %v115
  %v182 = vunpack.c.l.b16 %v31
  %v183 = vunpack.c.l.b16 %v32
  %v184 = vunpack.c.l.b16 %v33
  %v185 = vunpack.c.l.b16 %v34
  %v186 = vunpack.c.l.b16 %v35
  %v187 = vunpack.c.l.b16 %v36
  %v188 = vunpack.c.l.b16 %v37
  %v189 = vunpack.c.l.b16 %v38
  %v190 = vunpack.c.l.b16 %v39
  %v191 = vunpack.c.l.b16 %v40
  %v192 = vunpack.c.l.b16 %v41
  %v193 = vunpack.c.l.b16 %v42
  %v194 = vunpack.c.l.b16 %v43
  %v195 = vunpack.c.l.b16 %v44
  %v196 = vunpack.c.l.b16 %v45
  %v197 = vunpack.c.l.b16 %v46
  %v198 = vunpack.c.l.b16 %v47
  %v199 = vunpack.c.l.b16 %v48
  %v200 = vunpack.c.l.b16 %v49
  %v201 = vunpack.c.l.b16 %v50
  %v202 = vunpack.c.l.b16 %v51
  %v203 = vunpack.c.l.b16 %v52
  %v204 = vunpack.c.l.b16 %v53
  %v205 = vunpack.c.l.b16 %v54
  %v206 = vunpack.c.l.b16 %v55
  %v207 = vunpack.c.l.b16 %v56
  %v208 = vunpack.c.l.b16 %v57
  %v209 = vunpack.c.l.b16 %v58
  %v210 = vunpack.c.l.b16 %v59
  %v211 = vunpack.c.l.b16 %v60
  %v212 = vunpack.c.l.b16 %v61
  %v213 = vunpack.c.l.b16 %v62
  %v214 = vpack.c.b16 %v183, %v182
  %v215 = vpack.c.b16 %v185, %v184
  %v216 = vpack.c.b16 %v187, %v186
  %v217 = vpack.c.b16 %v189, %v188
  %v218 = vpack.c.b16 %v191, %v190
  %v219 = vpack.c.b16 %v193, %v192
  %v220 = vpack.c.b16 %v195, %v194
  %v221 = vpack.c.b16 %v197, %v196
  %v222 = vpack.c.b16 %v199, %v198
  %v223 = vpack.c.b16 %v201, %v200
  %v224 = vpack.c.b16 %v203, %v202
  %v225 = vpack.c.b16 %v205, %v204
  %v226 = vpack.c.b16 %v207, %v206
  %v227 = vpack.c.b16 %v209, %v208
  %v228 = vpack.c.b16 %v211, %v210
  %v229 = vpack.c.b16 %v213, %v212
  %246 = vmatprep.subr.bf16.mxu0 0
  %247 = vmatpush1.bf16.msra.mxu0 %v214
  %248 = vmatprep.subr.bf16.mxu0 0
  %249 = vmatpush1.bf16.msra.mxu0 %v215
  %250 = vmatprep.subr.bf16.mxu0 0
  %251 = vmatpush1.bf16.msra.mxu0 %v216
  %252 = vmatprep.subr.bf16.mxu0 0
  %253 = vmatpush1.bf16.msra.mxu0 %v217
  %254 = vmatprep.subr.bf16.mxu0 0
  %255 = vmatpush1.bf16.msra.mxu0 %v218
  %256 = vmatprep.subr.bf16.mxu0 0
  %257 = vmatpush1.bf16.msra.mxu0 %v219
  %258 = vmatprep.subr.bf16.mxu0 0
  %259 = vmatpush1.bf16.msra.mxu0 %v220
  %260 = vmatprep.subr.bf16.mxu0 0
  %261 = vmatpush1.bf16.msra.mxu0 %v221
  %262 = vmatprep.subr.bf16.mxu0 0
  %263 = vmatpush1.bf16.msra.mxu0 %v222
  %264 = vmatprep.subr.bf16.mxu0 0
  %265 = vmatpush1.bf16.msra.mxu0 %v223
  %266 = vmatprep.subr.bf16.mxu0 0
  %267 = vmatpush1.bf16.msra.mxu0 %v224
  %268 = vmatprep.subr.bf16.mxu0 0
  %269 = vmatpush1.bf16.msra.mxu0 %v225
  %270 = vmatprep.subr.bf16.mxu0 0
  %271 = vmatpush1.bf16.msra.mxu0 %v226
  %272 = vmatprep.subr.bf16.mxu0 0
  %273 = vmatpush1.bf16.msra.mxu0 %v227
  %274 = vmatprep.subr.bf16.mxu0 0
  %275 = vmatpush1.bf16.msra.mxu0 %v228
  %276 = vmatprep.subr.bf16.mxu0 0
  %277 = vmatpush1.bf16.msra.mxu0 %v229
  %278 = vmatprep.mubr.bf16.mxu0 %v119
  %279 = vmatmul.mubr.bf16.gmra.mrb[0].mxu0 %v118
  %v280 = vpop.f32.mrb[0].mxu0
  %v281 = vadd.f32 %v68, %v280
  %v282 = vpop.f32.mrb[0].mxu0
  %v283 = vpop.f32.mrb[0].mxu0
  %v284 = vadd.f32 %v68, %v283
  %v285 = vpop.f32.mrb[0].mxu0
  %286 = vmatprep.mubr.bf16.mxu0 %v121
  %287 = vmatmul.mubr.bf16.gmra.mrb[0].mxu0 %v120
  %v288 = vpop.f32.mrb[0].mxu0
  %v289 = vadd.f32 %v68, %v288
  %v290 = vpop.f32.mrb[0].mxu0
  %v291 = vpop.f32.mrb[0].mxu0
  %v292 = vadd.f32 %v68, %v291
  %v293 = vpop.f32.mrb[0].mxu0
  %294 = vmatprep.mubr.bf16.mxu0 %v123
  %295 = vmatmul.mubr.bf16.gmra.mrb[0].mxu0 %v122
  %v296 = vpop.f32.mrb[0].mxu0
  %v297 = vadd.f32 %v68, %v296
  %v298 = vpop.f32.mrb[0].mxu0
  %v299 = vpop.f32.mrb[0].mxu0
  %v300 = vadd.f32 %v68, %v299
  %v301 = vpop.f32.mrb[0].mxu0
  %302 = vmatprep.mubr.bf16.mxu0 %v125
  %303 = vmatmul.mubr.bf16.gmra.mrb[0].mxu0 %v124
  %v304 = vpop.f32.mrb[0].mxu0
  %v305 = vadd.f32 %v68, %v304
  %v306 = vpop.f32.mrb[0].mxu0
  %v307 = vpop.f32.mrb[0].mxu0
  %v308 = vadd.f32 %v68, %v307
  %v309 = vpop.f32.mrb[0].mxu0
  %310 = vmatprep.mubr.bf16.mxu0 %v127
  %311 = vmatmul.mubr.bf16.gmra.mrb[0].mxu0 %v126
  %v312 = vpop.f32.mrb[0].mxu0
  %v313 = vadd.f32 %v68, %v312
  %v314 = vpop.f32.mrb[0].mxu0
  %v315 = vpop.f32.mrb[0].mxu0
  %v316 = vadd.f32 %v68, %v315
  %v317 = vpop.f32.mrb[0].mxu0
  %318 = vmatprep.mubr.bf16.mxu0 %v129
  %319 = vmatmul.mubr.bf16.gmra.mrb[0].mxu0 %v128
  %v320 = vpop.f32.mrb[0].mxu0
  %v321 = vadd.f32 %v68, %v320
  %v322 = vpop.f32.mrb[0].mxu0
  %v323 = vpop.f32.mrb[0].mxu0
  %v324 = vadd.f32 %v68, %v323
  %v325 = vpop.f32.mrb[0].mxu0
  %326 = vmatprep.mubr.bf16.mxu0 %v131
  %327 = vmatmul.mubr.bf16.gmra.mrb[0].mxu0 %v130
  %v328 = vpop.f32.mrb[0].mxu0
  %v329 = vadd.f32 %v68, %v328
  %v330 = vpop.f32.mrb[0].mxu0
  %v331 = vpop.f32.mrb[0].mxu0
  %v332 = vadd.f32 %v68, %v331
  %v333 = vpop.f32.mrb[0].mxu0
  %334 = vmatprep.mubr.bf16.mxu0 %v133
  %335 = vmatmul.mubr.bf16.gmra.mrb[0].mxu0 %v132
  %v336 = vpop.f32.mrb[0].mxu0
  %v337 = vadd.f32 %v68, %v336
  %v338 = vpop.f32.mrb[0].mxu0
  %v339 = vpop.f32.mrb[0].mxu0
  %v340 = vadd.f32 %v68, %v339
  %v341 = vpop.f32.mrb[0].mxu0
  %342 = vdwg.mxu0
  %v343 = vmax.f32 %v281, 0.0
  %v344 = vmax.f32 %v284, 0.0
  %v345 = vmax.f32 %v289, 0.0
  %v346 = vmax.f32 %v292, 0.0
  %v347 = vmax.f32 %v297, 0.0
  %v348 = vmax.f32 %v300, 0.0
  %v349 = vmax.f32 %v305, 0.0
  %v350 = vmax.f32 %v308, 0.0
  %v351 = vmax.f32 %v313, 0.0
  %v352 = vmax.f32 %v316, 0.0
  %v353 = vmax.f32 %v321, 0.0
  %v354 = vmax.f32 %v324, 0.0
  %v355 = vmax.f32 %v329, 0.0
  %v356 = vmax.f32 %v332, 0.0
  %v357 = vmax.f32 %v337, 0.0
  %v358 = vmax.f32 %v340, 0.0
  %v359 = vpack.c.bf16 %v344, %v343
  %v360 = vpack.c.bf16 %v346, %v345
  %v361 = vpack.c.bf16 %v348, %v347
  %v362 = vpack.c.bf16 %v350, %v349
  %v363 = vpack.c.bf16 %v352, %v351
  %v364 = vpack.c.bf16 %v354, %v353
  %v365 = vpack.c.bf16 %v356, %v355
  %v366 = vpack.c.bf16 %v358, %v357
  %v375 = vunpack.c.l.b16 %v359
  %v376 = vunpack.c.h.b16 %v359
  %v377 = vunpack.c.l.b16 %v360
  %v378 = vunpack.c.h.b16 %v360
  %v379 = vunpack.c.l.b16 %v361
  %v380 = vunpack.c.h.b16 %v361
  %v381 = vunpack.c.l.b16 %v362
  %v382 = vunpack.c.h.b16 %v362
  %v383 = vunpack.c.l.b16 %v363
  %v384 = vunpack.c.h.b16 %v363
  %v385 = vunpack.c.l.b16 %v364
  %v386 = vunpack.c.h.b16 %v364
  %v387 = vunpack.c.l.b16 %v365
  %v388 = vunpack.c.h.b16 %v365
  %v389 = vunpack.c.l.b16 %v366
  %v390 = vunpack.c.h.b16 %v366
  %v391 = vpack.c.b16 %v375, %v375
  %v392 = vpack.c.b16 %v376, %v376
  %v393 = vpack.c.b16 %v377, %v377
  %v394 = vpack.c.b16 %v378, %v378
  %v395 = vpack.c.b16 %v379, %v379
  %v396 = vpack.c.b16 %v380, %v380
  %v397 = vpack.c.b16 %v381, %v381
  %v398 = vpack.c.b16 %v382, %v382
  %v399 = vpack.c.b16 %v383, %v383
  %v400 = vpack.c.b16 %v384, %v384
  %v401 = vpack.c.b16 %v385, %v385
  %v402 = vpack.c.b16 %v386, %v386
  %v403 = vpack.c.b16 %v387, %v387
  %v404 = vpack.c.b16 %v388, %v388
  %v405 = vpack.c.b16 %v389, %v389
  %v406 = vpack.c.b16 %v390, %v390
  %vm423 = vcmask 257024
  %424 = vst.msk [vmem:[%s3] sm:$0xf] %vm423, %v391
  %425 = vst.msk [vmem:[%s3 + $0x4] sm:$0xf] %vm423, %v392
  %426 = vst.msk [vmem:[%s3 + $0x8] sm:$0xf] %vm423, %v393
  %427 = vst.msk [vmem:[%s3 + $0xc] sm:$0xf] %vm423, %v394
  %428 = vst.msk [vmem:[%s3 + $0x10] sm:$0xf] %vm423, %v395
  %429 = vst.msk [vmem:[%s3 + $0x14] sm:$0xf] %vm423, %v396
  %430 = vst.msk [vmem:[%s3 + $0x18] sm:$0xf] %vm423, %v397
  %431 = vst.msk [vmem:[%s3 + $0x1c] sm:$0xf] %vm423, %v398
  %432 = vst.msk [vmem:[%s3 + $0x20] sm:$0xf] %vm423, %v399
  %433 = vst.msk [vmem:[%s3 + $0x24] sm:$0xf] %vm423, %v400
  %434 = vst.msk [vmem:[%s3 + $0x28] sm:$0xf] %vm423, %v401
  %435 = vst.msk [vmem:[%s3 + $0x2c] sm:$0xf] %vm423, %v402
  %436 = vst.msk [vmem:[%s3 + $0x30] sm:$0xf] %vm423, %v403
  %437 = vst.msk [vmem:[%s3 + $0x34] sm:$0xf] %vm423, %v404
  %438 = vst.msk [vmem:[%s3 + $0x38] sm:$0xf] %vm423, %v405
  %439 = vst.msk [vmem:[%s3 + $0x3c] sm:$0xf] %vm423, %v406
  // Predicated region
  $region14: #{dqn_forward.3} parent=0 // pred_check
    _
  $region15: #{dqn_forward.3} parent=0 // pred_check_branch
    %441 = sbr.rel (0) target = $region17
  $region16: #{dqn_forward.3} parent=0 // pred_region
    _
  $region17: #{dqn_forward.3} parent=0 // pred_fallthru
    _
  // Predicated region
  $region18: #{dqn_forward.3} parent=0 // pred_check
    _
  $region19: #{dqn_forward.3} parent=0 // pred_check_branch
    %443 = sbr.rel (0) target = $region21
  $region20: #{dqn_forward.3} parent=0 // pred_region
    _
  $region21: #{dqn_forward.3} parent=0 // pred_fallthru
    _

// kernel: dqn_forward.4
$region0: #{dqn_forward.4}
  #allocation0 [shape = 'u32[]', space=smem, size = 0x4, offset = 0x4, fixed_abs, tag = 'smem constant byte address 0x4 - core index']
  #allocation1 [shape = 'u32[144,128]{1,0:T(1,128)}', space=vmem, size = 0x12000, scoped, tag = 'internal scratch']
  %s0 = inlined_call_operand.vmem [shape: bf16[18,512], index: 0, kind: input, shape index: {}]
  %s1 = inlined_call_operand.vmem [shape: bf16[512,64], index: 1, kind: input, shape index: {}]
  %s2 = inlined_call_operand.vmem [shape: f32[1,64], index: 2, kind: input, shape index: {}]
  %s3 = inlined_call_operand.vmem [shape: bf16[18,64], index: 3, kind: output, shape index: {}]
  %s4 = sld [smem:[#allocation0]]
  $region22: #{dqn_forward.4} parent=0
    _
  %s6 = ssub.s32 1, %s4
  %s7 = scalar_select 0, %s6, %s4
  // Predicated region
  $region2: #{dqn_forward.4} parent=0 // pred_check
    _
  $region3: #{dqn_forward.4} parent=0 // pred_check_branch
    %9 = sbr.rel (0) target = $region5
  $region4: #{dqn_forward.4} parent=0 // pred_region
    _
  $region5: #{dqn_forward.4} parent=0 // pred_fallthru
    _
  // Predicated region
  $region6: #{dqn_forward.4} parent=0 // pred_check
    _
  $region7: #{dqn_forward.4} parent=0 // pred_check_branch
    %11 = sbr.rel (0) target = $region9
  $region8: #{dqn_forward.4} parent=0 // pred_region
    _
  $region9: #{dqn_forward.4} parent=0 // pred_fallthru
    _
  // Predicated region
  $region10: #{dqn_forward.4} parent=0 // pred_check
    _
  $region11: #{dqn_forward.4} parent=0 // pred_check_branch
    %13 = sbr.rel (0) target = $region13
  $region12: #{dqn_forward.4} parent=0 // pred_region
    _
  $region13: #{dqn_forward.4} parent=0 // pred_fallthru
    _
  %v15 = vld [vmem:[%s0] sm:$0xff]
  %v16 = vld [vmem:[%s0 + $0x8] sm:$0xff]
  %v17 = vld [vmem:[%s0 + $0x10] sm:$0xff]
  %v18 = vld [vmem:[%s0 + $0x18] sm:$0xff]
  %v19 = vld [vmem:[%s0 + $0x20] sm:$0x11]
  %v20 = vld [vmem:[%s0 + $0x28] sm:$0x11]
  %v21 = vld [vmem:[%s1] sm:$0xf]
  %v22 = vld [vmem:[%s1 + $0x4] sm:$0xf]
  %v23 = vld [vmem:[%s1 + $0x8] sm:$0xf]
  %v24 = vld [vmem:[%s1 + $0xc] sm:$0xf]
  %v25 = vld [vmem:[%s1 + $0x10] sm:$0xf]
  %v26 = vld [vmem:[%s1 + $0x14] sm:$0xf]
  %v27 = vld [vmem:[%s1 + $0x18] sm:$0xf]
  %v28 = vld [vmem:[%s1 + $0x1c] sm:$0xf]
  %v29 = vld [vmem:[%s1 + $0x20] sm:$0xf]
  %v30 = vld [vmem:[%s1 + $0x24] sm:$0xf]
  %v31 = vld [vmem:[%s1 + $0x28] sm:$0xf]
  %v32 = vld [vmem:[%s1 + $0x2c] sm:$0xf]
  %v33 = vld [vmem:[%s1 + $0x30] sm:$0xf]
  %v34 = vld [vmem:[%s1 + $0x34] sm:$0xf]
  %v35 = vld [vmem:[%s1 + $0x38] sm:$0xf]
  %v36 = vld [vmem:[%s1 + $0x3c] sm:$0xf]
  %v37 = vld [vmem:[%s1 + $0x40] sm:$0xf]
  %v38 = vld [vmem:[%s1 + $0x44] sm:$0xf]
  %v39 = vld [vmem:[%s1 + $0x48] sm:$0xf]
  %v40 = vld [vmem:[%s1 + $0x4c] sm:$0xf]
  %v41 = vld [vmem:[%s1 + $0x50] sm:$0xf]
  %v42 = vld [vmem:[%s1 + $0x54] sm:$0xf]
  %v43 = vld [vmem:[%s1 + $0x58] sm:$0xf]
  %v44 = vld [vmem:[%s1 + $0x5c] sm:$0xf]
  %v45 = vld [vmem:[%s1 + $0x60] sm:$0xf]
  %v46 = vld [vmem:[%s1 + $0x64] sm:$0xf]
  %v47 = vld [vmem:[%s1 + $0x68] sm:$0xf]
  %v48 = vld [vmem:[%s1 + $0x6c] sm:$0xf]
  %v49 = vld [vmem:[%s1 + $0x70] sm:$0xf]
  %v50 = vld [vmem:[%s1 + $0x74] sm:$0xf]
  %v51 = vld [vmem:[%s1 + $0x78] sm:$0xf]
  %v52 = vld [vmem:[%s1 + $0x7c] sm:$0xf]
  %v53 = vld [vmem:[%s1 + $0x80] sm:$0xf]
  %v54 = vld [vmem:[%s1 + $0x84] sm:$0xf]
  %v55 = vld [vmem:[%s1 + $0x88] sm:$0xf]
  %v56 = vld [vmem:[%s1 + $0x8c] sm:$0xf]
  %v57 = vld [vmem:[%s1 + $0x90] sm:$0xf]
  %v58 = vld [vmem:[%s1 + $0x94] sm:$0xf]
  %v59 = vld [vmem:[%s1 + $0x98] sm:$0xf]
  %v60 = vld [vmem:[%s1 + $0x9c] sm:$0xf]
  %v61 = vld [vmem:[%s1 + $0xa0] sm:$0xf]
  %v62 = vld [vmem:[%s1 + $0xa4] sm:$0xf]
  %v63 = vld [vmem:[%s1 + $0xa8] sm:$0xf]
  %v64 = vld [vmem:[%s1 + $0xac] sm:$0xf]
  %v65 = vld [vmem:[%s1 + $0xb0] sm:$0xf]
  %v66 = vld [vmem:[%s1 + $0xb4] sm:$0xf]
  %v67 = vld [vmem:[%s1 + $0xb8] sm:$0xf]
  %v68 = vld [vmem:[%s1 + $0xbc] sm:$0xf]
  %v69 = vld [vmem:[%s1 + $0xc0] sm:$0xf]
  %v70 = vld [vmem:[%s1 + $0xc4] sm:$0xf]
  %v71 = vld [vmem:[%s1 + $0xc8] sm:$0xf]
  %v72 = vld [vmem:[%s1 + $0xcc] sm:$0xf]
  %v73 = vld [vmem:[%s1 + $0xd0] sm:$0xf]
  %v74 = vld [vmem:[%s1 + $0xd4] sm:$0xf]
  %v75 = vld [vmem:[%s1 + $0xd8] sm:$0xf]
  %v76 = vld [vmem:[%s1 + $0xdc] sm:$0xf]
  %v77 = vld [vmem:[%s1 + $0xe0] sm:$0xf]
  %v78 = vld [vmem:[%s1 + $0xe4] sm:$0xf]
  %v79 = vld [vmem:[%s1 + $0xe8] sm:$0xf]
  %v80 = vld [vmem:[%s1 + $0xec] sm:$0xf]
  %v81 = vld [vmem:[%s1 + $0xf0] sm:$0xf]
  %v82 = vld [vmem:[%s1 + $0xf4] sm:$0xf]
  %v83 = vld [vmem:[%s1 + $0xf8] sm:$0xf]
  %v84 = vld [vmem:[%s1 + $0xfc] sm:$0xf]
  %v85 = vld [vmem:[%s2] sm:$0x1]
  %v87 = vlaneseq
  %v88 = vshrl.u32 %v87, 7
  %v89 = vsub.s32 0, %v88
  %v90 = vrot.slane %v85, %v89
  %v98 = vunpack.c.l.b16 %v15
  %v99 = vunpack.c.h.b16 %v15
  %v100 = vunpack.c.l.b16 %v16
  %v101 = vunpack.c.h.b16 %v16
  %v102 = vunpack.c.l.b16 %v17
  %v103 = vunpack.c.h.b16 %v17
  %v104 = vunpack.c.l.b16 %v18
  %v105 = vunpack.c.h.b16 %v18
  %v106 = vunpack.c.l.b16 %v19
  %v107 = vunpack.c.h.b16 %v19
  %v108 = vunpack.c.l.b16 %v20
  %v109 = vunpack.c.h.b16 %v20
  %v110 = vpack.c.b16 %v102, %v98
  %v111 = vpack.c.b16 %v103, %v99
  %v112 = vpack.c.b16 %v104, %v100
  %v113 = vpack.c.b16 %v105, %v101
  %v114 = vpack.c.b16 %v106, %v106
  %v115 = vpack.c.b16 %v107, %v107
  %v116 = vpack.c.b16 %v108, %v108
  %v117 = vpack.c.b16 %v109, %v109
  %v190 = vunpack.c.l.b16 %v21
  %v191 = vunpack.c.l.b16 %v22
  %v192 = vunpack.c.l.b16 %v23
  %v193 = vunpack.c.l.b16 %v24
  %v194 = vunpack.c.l.b16 %v25
  %v195 = vunpack.c.l.b16 %v26
  %v196 = vunpack.c.l.b16 %v27
  %v197 = vunpack.c.l.b16 %v28
  %v198 = vunpack.c.l.b16 %v29
  %v199 = vunpack.c.l.b16 %v30
  %v200 = vunpack.c.l.b16 %v31
  %v201 = vunpack.c.l.b16 %v32
  %v202 = vunpack.c.l.b16 %v33
  %v203 = vunpack.c.l.b16 %v34
  %v204 = vunpack.c.l.b16 %v35
  %v205 = vunpack.c.l.b16 %v36
  %v206 = vunpack.c.l.b16 %v37
  %v207 = vunpack.c.l.b16 %v38
  %v208 = vunpack.c.l.b16 %v39
  %v209 = vunpack.c.l.b16 %v40
  %v210 = vunpack.c.l.b16 %v41
  %v211 = vunpack.c.l.b16 %v42
  %v212 = vunpack.c.l.b16 %v43
  %v213 = vunpack.c.l.b16 %v44
  %v214 = vunpack.c.l.b16 %v45
  %v215 = vunpack.c.l.b16 %v46
  %v216 = vunpack.c.l.b16 %v47
  %v217 = vunpack.c.l.b16 %v48
  %v218 = vunpack.c.l.b16 %v49
  %v219 = vunpack.c.l.b16 %v50
  %v220 = vunpack.c.l.b16 %v51
  %v221 = vunpack.c.l.b16 %v52
  %v222 = vunpack.c.l.b16 %v53
  %v223 = vunpack.c.l.b16 %v54
  %v224 = vunpack.c.l.b16 %v55
  %v225 = vunpack.c.l.b16 %v56
  %v226 = vunpack.c.l.b16 %v57
  %v227 = vunpack.c.l.b16 %v58
  %v228 = vunpack.c.l.b16 %v59
  %v229 = vunpack.c.l.b16 %v60
  %v230 = vunpack.c.l.b16 %v61
  %v231 = vunpack.c.l.b16 %v62
  %v232 = vunpack.c.l.b16 %v63
  %v233 = vunpack.c.l.b16 %v64
  %v234 = vunpack.c.l.b16 %v65
  %v235 = vunpack.c.l.b16 %v66
  %v236 = vunpack.c.l.b16 %v67
  %v237 = vunpack.c.l.b16 %v68
  %v238 = vunpack.c.l.b16 %v69
  %v239 = vunpack.c.l.b16 %v70
  %v240 = vunpack.c.l.b16 %v71
  %v241 = vunpack.c.l.b16 %v72
  %v242 = vunpack.c.l.b16 %v73
  %v243 = vunpack.c.l.b16 %v74
  %v244 = vunpack.c.l.b16 %v75
  %v245 = vunpack.c.l.b16 %v76
  %v246 = vunpack.c.l.b16 %v77
  %v247 = vunpack.c.l.b16 %v78
  %v248 = vunpack.c.l.b16 %v79
  %v249 = vunpack.c.l.b16 %v80
  %v250 = vunpack.c.l.b16 %v81
  %v251 = vunpack.c.l.b16 %v82
  %v252 = vunpack.c.l.b16 %v83
  %v253 = vunpack.c.l.b16 %v84
  %v254 = vpack.c.b16 %v191, %v190
  %v255 = vpack.c.b16 %v193, %v192
  %v256 = vpack.c.b16 %v195, %v194
  %v257 = vpack.c.b16 %v197, %v196
  %v258 = vpack.c.b16 %v199, %v198
  %v259 = vpack.c.b16 %v201, %v200
  %v260 = vpack.c.b16 %v203, %v202
  %v261 = vpack.c.b16 %v205, %v204
  %v262 = vpack.c.b16 %v207, %v206
  %v263 = vpack.c.b16 %v209, %v208
  %v264 = vpack.c.b16 %v211, %v210
  %v265 = vpack.c.b16 %v213, %v212
  %v266 = vpack.c.b16 %v215, %v214
  %v267 = vpack.c.b16 %v217, %v216
  %v268 = vpack.c.b16 %v219, %v218
  %v269 = vpack.c.b16 %v221, %v220
  %v270 = vpack.c.b16 %v223, %v222
  %v271 = vpack.c.b16 %v225, %v224
  %v272 = vpack.c.b16 %v227, %v226
  %v273 = vpack.c.b16 %v229, %v228
  %v274 = vpack.c.b16 %v231, %v230
  %v275 = vpack.c.b16 %v233, %v232
  %v276 = vpack.c.b16 %v235, %v234
  %v277 = vpack.c.b16 %v237, %v236
  %v278 = vpack.c.b16 %v239, %v238
  %v279 = vpack.c.b16 %v241, %v240
  %v280 = vpack.c.b16 %v243, %v242
  %v281 = vpack.c.b16 %v245, %v244
  %v282 = vpack.c.b16 %v247, %v246
  %v283 = vpack.c.b16 %v249, %v248
  %v284 = vpack.c.b16 %v251, %v250
  %v285 = vpack.c.b16 %v253, %v252
  %318 = vmatprep.subr.bf16.mxu0 0
  %319 = vmatpush1.bf16.msra.mxu0 %v254
  %320 = vmatprep.subr.bf16.mxu0 0
  %321 = vmatpush1.bf16.msra.mxu0 %v255
  %322 = vmatprep.subr.bf16.mxu0 0
  %323 = vmatpush1.bf16.msra.mxu0 %v256
  %324 = vmatprep.subr.bf16.mxu0 0
  %325 = vmatpush1.bf16.msra.mxu0 %v257
  %326 = vmatprep.subr.bf16.mxu0 0
  %327 = vmatpush1.bf16.msra.mxu0 %v258
  %328 = vmatprep.subr.bf16.mxu0 0
  %329 = vmatpush1.bf16.msra.mxu0 %v259
  %330 = vmatprep.subr.bf16.mxu0 0
  %331 = vmatpush1.bf16.msra.mxu0 %v260
  %332 = vmatprep.subr.bf16.mxu0 0
  %333 = vmatpush1.bf16.msra.mxu0 %v261
  %334 = vmatprep.subr.bf16.mxu0 0
  %335 = vmatpush1.bf16.msra.mxu0 %v262
  %336 = vmatprep.subr.bf16.mxu0 0
  %337 = vmatpush1.bf16.msra.mxu0 %v263
  %338 = vmatprep.subr.bf16.mxu0 0
  %339 = vmatpush1.bf16.msra.mxu0 %v264
  %340 = vmatprep.subr.bf16.mxu0 0
  %341 = vmatpush1.bf16.msra.mxu0 %v265
  %342 = vmatprep.subr.bf16.mxu0 0
  %343 = vmatpush1.bf16.msra.mxu0 %v266
  %344 = vmatprep.subr.bf16.mxu0 0
  %345 = vmatpush1.bf16.msra.mxu0 %v267
  %346 = vmatprep.subr.bf16.mxu0 0
  %347 = vmatpush1.bf16.msra.mxu0 %v268
  %348 = vmatprep.subr.bf16.mxu0 0
  %349 = vmatpush1.bf16.msra.mxu0 %v269
  %350 = vmatprep.mubr.bf16.mxu0 %v111
  %351 = vmatmul.mubr.bf16.gmra.mrb[0].mxu0 %v110
  %v352 = vpop.f32.mrb[0].mxu0
  %v353 = vadd.f32 %v90, %v352
  %v354 = vpop.f32.mrb[0].mxu0
  %v355 = vpop.f32.mrb[0].mxu0
  %v356 = vadd.f32 %v90, %v355
  %v357 = vpop.f32.mrb[0].mxu0
  %358 = vmatprep.mubr.bf16.mxu0 %v115
  %359 = vmatmul.mubr.bf16.gmra.mrb[0].mxu0 %v114
  %v360 = vpop.f32.mrb[0].mxu0
  %v361 = vadd.f32 %v90, %v360
  %v362 = vpop.f32.mrb[0].mxu0
  %v363 = vpop.f32.mrb[0].mxu0
  %v364 = vpop.f32.mrb[0].mxu0
  %365 = vdwg.mxu0
  %366 = vmatprep.subr.bf16.mxu0 0
  %367 = vmatpush1.bf16.msra.mxu0 %v270
  %368 = vmatprep.subr.bf16.mxu0 0
  %369 = vmatpush1.bf16.msra.mxu0 %v271
  %370 = vmatprep.subr.bf16.mxu0 0
  %371 = vmatpush1.bf16.msra.mxu0 %v272
  %372 = vmatprep.subr.bf16.mxu0 0
  %373 = vmatpush1.bf16.msra.mxu0 %v273
  %374 = vmatprep.subr.bf16.mxu0 0
  %375 = vmatpush1.bf16.msra.mxu0 %v274
  %376 = vmatprep.subr.bf16.mxu0 0
  %377 = vmatpush1.bf16.msra.mxu0 %v275
  %378 = vmatprep.subr.bf16.mxu0 0
  %379 = vmatpush1.bf16.msra.mxu0 %v276
  %380 = vmatprep.subr.bf16.mxu0 0
  %381 = vmatpush1.bf16.msra.mxu0 %v277
  %382 = vmatprep.subr.bf16.mxu0 0
  %383 = vmatpush1.bf16.msra.mxu0 %v278
  %384 = vmatprep.subr.bf16.mxu0 0
  %385 = vmatpush1.bf16.msra.mxu0 %v279
  %386 = vmatprep.subr.bf16.mxu0 0
  %387 = vmatpush1.bf16.msra.mxu0 %v280
  %388 = vmatprep.subr.bf16.mxu0 0
  %389 = vmatpush1.bf16.msra.mxu0 %v281
  %390 = vmatprep.subr.bf16.mxu0 0
  %391 = vmatpush1.bf16.msra.mxu0 %v282
  %392 = vmatprep.subr.bf16.mxu0 0
  %393 = vmatpush1.bf16.msra.mxu0 %v283
  %394 = vmatprep.subr.bf16.mxu0 0
  %395 = vmatpush1.bf16.msra.mxu0 %v284
  %396 = vmatprep.subr.bf16.mxu0 0
  %397 = vmatpush1.bf16.msra.mxu0 %v285
  %398 = vmatprep.mubr.bf16.mxu0 %v113
  %399 = vmatmul.mubr.bf16.gmra.mrb[0].mxu0 %v112
  %v400 = vpop.f32.mrb[0].mxu0
  %v401 = vadd.f32 %v353, %v400
  %v402 = vpop.f32.mrb[0].mxu0
  %v403 = vpop.f32.mrb[0].mxu0
  %v404 = vadd.f32 %v356, %v403
  %v405 = vpop.f32.mrb[0].mxu0
  %406 = vmatprep.mubr.bf16.mxu0 %v117
  %407 = vmatmul.mubr.bf16.gmra.mrb[0].mxu0 %v116
  %v408 = vpop.f32.mrb[0].mxu0
  %v409 = vadd.f32 %v361, %v408
  %v410 = vpop.f32.mrb[0].mxu0
  %v411 = vpop.f32.mrb[0].mxu0
  %v412 = vpop.f32.mrb[0].mxu0
  %413 = vdwg.mxu0
  %v414 = vmax.f32 %v401, 0.0
  %v415 = vmax.f32 %v404, 0.0
  %v416 = vmax.f32 %v409, 0.0
  %v417 = vpack.c.bf16 %v415, %v414
  %v418 = vpack.c.bf16 %v416, %v416
  %v421 = vunpack.c.l.b16 %v417
  %v422 = vunpack.c.h.b16 %v417
  %v423 = vunpack.c.l.b16 %v418
  %v424 = vpack.c.b16 %v421, %v421
  %v425 = vpack.c.b16 %v422, %v422
  %v426 = vpack.c.b16 %v423, %v423
  %vm430 = vcmask 519168
  %431 = vst.msk [vmem:[%s3] sm:$0xf] %vm430, %v424
  %432 = vst.msk [vmem:[%s3 + $0x4] sm:$0xf] %vm430, %v425
  %vm433 = vcmask 516096
  %434 = vst.msk [vmem:[%s3 + $0x8] sm:$0x1] %vm433, %v426
  // Predicated region
  $region14: #{dqn_forward.4} parent=0 // pred_check
    _
  $region15: #{dqn_forward.4} parent=0 // pred_check_branch
    %436 = sbr.rel (0) target = $region17
  $region16: #{dqn_forward.4} parent=0 // pred_region
    _
  $region17: #{dqn_forward.4} parent=0 // pred_fallthru
    _
  // Predicated region
  $region18: #{dqn_forward.4} parent=0 // pred_check
    _
  $region19: #{dqn_forward.4} parent=0 // pred_check_branch
    %438 = sbr.rel (0) target = $region21
  $region20: #{dqn_forward.4} parent=0 // pred_region
    _
  $region21: #{dqn_forward.4} parent=0 // pred_fallthru
    _

// kernel: dqn_forward.5
$region0: #{dqn_forward.5}
  #allocation0 [shape = 'u32[]', space=smem, size = 0x4, offset = 0x4, fixed_abs, tag = 'smem constant byte address 0x4 - core index']
  #allocation1 [shape = 'u32[144,128]{1,0:T(1,128)}', space=vmem, size = 0x12000, scoped, tag = 'internal scratch']
  #allocation2 [shape = 'f32[2,512]{1,0:T(2,128)}', space=vmem, size = 0x1000, scoped, tag = 'scratch operand']
  %s0 = inlined_call_operand.vmem [shape: bf16[1,2,576], index: 0, kind: input, shape index: {}]
  %s1 = inlined_call_operand.vmem [shape: bf16[576,64], index: 1, kind: input, shape index: {}]
  %s2 = inlined_call_operand.vmem [shape: f32[1,64], index: 2, kind: input, shape index: {}]
  %s3 = inlined_call_operand.vmem [shape: bf16[1,64,512], index: 3, kind: input, shape index: {}]
  %s4 = inlined_call_operand.vmem [shape: f32[1,512], index: 4, kind: input, shape index: {}]
  %s5 = inlined_call_operand.vmem [shape: bf16[512,128], index: 5, kind: input, shape index: {}]
  %s6 = inlined_call_operand.vmem [shape: f32[1,128], index: 6, kind: input, shape index: {}]
  %s7 = inlined_call_operand.hbm [shape: f32[2,128], index: 7, kind: output, shape index: {}]
  %s8 = sld [smem:[#allocation0]]
  $region46: #{dqn_forward.5} parent=0
    _
  %s10 = ssub.s32 1, %s8
  %s11 = scalar_select 0, %s10, %s8
  $region1: #{dqn_forward.5} parent=0
    #allocation3 [shape = 'u8[1024]{0}', space=vmem, size = 0x400, scoped, tag = 'output window, operand 0, single buffered']
    #allocation4 [shape = 's32[1]{0}', space=sflag, size = 0x4, scoped, tag = 'scoped memory for dqn_forward.5']
    %12 = vsyncpa [#allocation4], 0
    // Predicated region
    $region2: #{dqn_forward.5} parent=1 // pred_check
      _
    $region3: #{dqn_forward.5} parent=1 // pred_check_branch
      %14 = sbr.rel (0) target = $region5
    $region4: #{dqn_forward.5} parent=1 // pred_region
      _
    $region5: #{dqn_forward.5} parent=1 // pred_fallthru
      _
    // Predicated region
    $region6: #{dqn_forward.5} parent=1 // pred_check
      _
    $region7: #{dqn_forward.5} parent=1 // pred_check_branch
      %16 = sbr.rel (0) target = $region9
    $region8: #{dqn_forward.5} parent=1 // pred_region
      _
    $region9: #{dqn_forward.5} parent=1 // pred_fallthru
      _
    // Predicated region
    $region10: #{dqn_forward.5} parent=1 // pred_check
      _
    $region11: #{dqn_forward.5} parent=1 // pred_check_branch
      %18 = sbr.rel (0) target = $region13
    $region12: #{dqn_forward.5} parent=1 // pred_region
      _
    $region13: #{dqn_forward.5} parent=1 // pred_fallthru
      _
    // Predicated region
    $region14: #{dqn_forward.5} parent=1 // pred_check
      _
    $region15: #{dqn_forward.5} parent=1 // pred_check_branch
      %20 = sbr.rel (0) target = $region17
    $region16: #{dqn_forward.5} parent=1 // pred_region
      _
    $region17: #{dqn_forward.5} parent=1 // pred_fallthru
      _
    // Predicated region
    $region18: #{dqn_forward.5} parent=1 // pred_check
      _
    $region19: #{dqn_forward.5} parent=1 // pred_check_branch
      %22 = sbr.rel (0) target = $region21
    $region20: #{dqn_forward.5} parent=1 // pred_region
      _
    $region21: #{dqn_forward.5} parent=1 // pred_fallthru
      _
    // Predicated region
    $region22: #{dqn_forward.5} parent=1 // pred_check
      _
    $region23: #{dqn_forward.5} parent=1 // pred_check_branch
      %24 = sbr.rel (0) target = $region25
    $region24: #{dqn_forward.5} parent=1 // pred_region
      _
    $region25: #{dqn_forward.5} parent=1 // pred_fallthru
      _
    // Predicated region
    $region26: #{dqn_forward.5} parent=1 // pred_check
      _
    $region27: #{dqn_forward.5} parent=1 // pred_check_branch
      %26 = sbr.rel (0) target = $region29
    $region28: #{dqn_forward.5} parent=1 // pred_region
      _
    $region29: #{dqn_forward.5} parent=1 // pred_fallthru
      _
    %p28 = scmp.eq.s32.totalorder 0, 0
    // Predicated region
    $region30: #{dqn_forward.5} parent=1 // pred_check
      %p29 = pneg %p28
    $region31: #{dqn_forward.5} parent=1 // pred_check_branch
      %31 = sbr.rel (%p29) target = $region33
    $region32: #{dqn_forward.5} parent=1 // pred_region
      %32 = vst [vmem:[#allocation2] sm:$0xff] 0.0
    $region33: #{dqn_forward.5} parent=1 // pred_fallthru
      _
    %v33 = vld [vmem:[%s0] sm:$0x1f]
    %v34 = vld [vmem:[%s1] sm:$0xf]
    %v35 = vld [vmem:[%s1 + $0x4] sm:$0xf]
    %v36 = vld [vmem:[%s1 + $0x8] sm:$0xf]
    %v37 = vld [vmem:[%s1 + $0xc] sm:$0xf]
    %v38 = vld [vmem:[%s1 + $0x10] sm:$0xf]
    %v39 = vld [vmem:[%s1 + $0x14] sm:$0xf]
    %v40 = vld [vmem:[%s1 + $0x18] sm:$0xf]
    %v41 = vld [vmem:[%s1 + $0x1c] sm:$0xf]
    %v42 = vld [vmem:[%s1 + $0x20] sm:$0xf]
    %v43 = vld [vmem:[%s1 + $0x24] sm:$0xf]
    %v44 = vld [vmem:[%s1 + $0x28] sm:$0xf]
    %v45 = vld [vmem:[%s1 + $0x2c] sm:$0xf]
    %v46 = vld [vmem:[%s1 + $0x30] sm:$0xf]
    %v47 = vld [vmem:[%s1 + $0x34] sm:$0xf]
    %v48 = vld [vmem:[%s1 + $0x38] sm:$0xf]
    %v49 = vld [vmem:[%s1 + $0x3c] sm:$0xf]
    %v50 = vld [vmem:[%s1 + $0x40] sm:$0xf]
    %v51 = vld [vmem:[%s1 + $0x44] sm:$0xf]
    %v52 = vld [vmem:[%s1 + $0x48] sm:$0xf]
    %v53 = vld [vmem:[%s1 + $0x4c] sm:$0xf]
    %v54 = vld [vmem:[%s1 + $0x50] sm:$0xf]
    %v55 = vld [vmem:[%s1 + $0x54] sm:$0xf]
    %v56 = vld [vmem:[%s1 + $0x58] sm:$0xf]
    %v57 = vld [vmem:[%s1 + $0x5c] sm:$0xf]
    %v58 = vld [vmem:[%s1 + $0x60] sm:$0xf]
    %v59 = vld [vmem:[%s1 + $0x64] sm:$0xf]
    %v60 = vld [vmem:[%s1 + $0x68] sm:$0xf]
    %v61 = vld [vmem:[%s1 + $0x6c] sm:$0xf]
    %v62 = vld [vmem:[%s1 + $0x70] sm:$0xf]
    %v63 = vld [vmem:[%s1 + $0x74] sm:$0xf]
    %v64 = vld [vmem:[%s1 + $0x78] sm:$0xf]
    %v65 = vld [vmem:[%s1 + $0x7c] sm:$0xf]
    %v66 = vld [vmem:[%s1 + $0x80] sm:$0xf]
    %v67 = vld [vmem:[%s1 + $0x84] sm:$0xf]
    %v68 = vld [vmem:[%s1 + $0x88] sm:$0xf]
    %v69 = vld [vmem:[%s1 + $0x8c] sm:$0xf]
    %v70 = vld [vmem:[%s1 + $0x90] sm:$0xf]
    %v71 = vld [vmem:[%s1 + $0x94] sm:$0xf]
    %v72 = vld [vmem:[%s1 + $0x98] sm:$0xf]
    %v73 = vld [vmem:[%s1 + $0x9c] sm:$0xf]
    %v74 = vld [vmem:[%s1 + $0xa0] sm:$0xf]
    %v75 = vld [vmem:[%s1 + $0xa4] sm:$0xf]
    %v76 = vld [vmem:[%s1 + $0xa8] sm:$0xf]
    %v77 = vld [vmem:[%s1 + $0xac] sm:$0xf]
    %v78 = vld [vmem:[%s1 + $0xb0] sm:$0xf]
    %v79 = vld [vmem:[%s1 + $0xb4] sm:$0xf]
    %v80 = vld [vmem:[%s1 + $0xb8] sm:$0xf]
    %v81 = vld [vmem:[%s1 + $0xbc] sm:$0xf]
    %v82 = vld [vmem:[%s1 + $0xc0] sm:$0xf]
    %v83 = vld [vmem:[%s1 + $0xc4] sm:$0xf]
    %v84 = vld [vmem:[%s1 + $0xc8] sm:$0xf]
    %v85 = vld [vmem:[%s1 + $0xcc] sm:$0xf]
    %v86 = vld [vmem:[%s1 + $0xd0] sm:$0xf]
    %v87 = vld [vmem:[%s1 + $0xd4] sm:$0xf]
    %v88 = vld [vmem:[%s1 + $0xd8] sm:$0xf]
    %v89 = vld [vmem:[%s1 + $0xdc] sm:$0xf]
    %v90 = vld [vmem:[%s1 + $0xe0] sm:$0xf]
    %v91 = vld [vmem:[%s1 + $0xe4] sm:$0xf]
    %v92 = vld [vmem:[%s1 + $0xe8] sm:$0xf]
    %v93 = vld [vmem:[%s1 + $0xec] sm:$0xf]
    %v94 = vld [vmem:[%s1 + $0xf0] sm:$0xf]
    %v95 = vld [vmem:[%s1 + $0xf4] sm:$0xf]
    %v96 = vld [vmem:[%s1 + $0xf8] sm:$0xf]
    %v97 = vld [vmem:[%s1 + $0xfc] sm:$0xf]
    %v98 = vld [vmem:[%s1 + $0x100] sm:$0xf]
    %v99 = vld [vmem:[%s1 + $0x104] sm:$0xf]
    %v100 = vld [vmem:[%s1 + $0x108] sm:$0xf]
    %v101 = vld [vmem:[%s1 + $0x10c] sm:$0xf]
    %v102 = vld [vmem:[%s1 + $0x110] sm:$0xf]
    %v103 = vld [vmem:[%s1 + $0x114] sm:$0xf]
    %v104 = vld [vmem:[%s1 + $0x118] sm:$0xf]
    %v105 = vld [vmem:[%s1 + $0x11c] sm:$0xf]
    %v106 = vld [vmem:[%s2] sm:$0x1]
    %v108 = vlaneseq
    %v109 = vshrl.u32 %v108, 7
    %v110 = vsub.s32 0, %v109
    %v111 = vrot.slane %v106, %v110
    %v114 = vcombine.high %v33, %v33
    %v116 = vunpack.c.l.s4 1966171168
    %v117 = vunpack.c.0.s8 %v116
    %v118 = vlaneseq
    %v119 = vshrl.u32 %v118, 7
    %v120 = vsub.s32 %v117, %v119
    %v121 = vrot.slane %v33, %v120
    %v123 = vunpack.c.l.s4 1966171168
    %v124 = vunpack.c.0.s8 %v123
    %v125 = vlaneseq
    %v126 = vshrl.u32 %v125, 7
    %v127 = vsub.s32 %v124, %v126
    %v128 = vrot.slane %v114, %v127
    %v129 = vcombine.high %v121, %v121
    %v131 = vunpack.c.l.s4 1966171168
    %v132 = vunpack.c.0.s8 %v131
    %v133 = vlaneseq
    %v134 = vshrl.u32 %v133, 7
    %v135 = vsub.s32 %v132, %v134
    %v136 = vrot.slane %v121, %v135
    %v138 = vunpack.c.l.s4 1966171168
    %v139 = vunpack.c.0.s8 %v138
    %v140 = vlaneseq
    %v141 = vshrl.u32 %v140, 7
    %v142 = vsub.s32 %v139, %v141
    %v143 = vrot.slane %v128, %v142
    %v145 = vunpack.c.l.s4 1966171168
    %v146 = vunpack.c.0.s8 %v145
    %v147 = vlaneseq
    %v148 = vshrl.u32 %v147, 7
    %v149 = vsub.s32 %v146, %v148
    %v150 = vrot.slane %v129, %v149
    %v151 = vcombine.high %v136, %v136
    %v152 = vcombine.high %v150, %v150
    %v229 = vunpack.c.l.b16 %v34
    %v230 = vunpack.c.l.b16 %v35
    %v231 = vunpack.c.l.b16 %v36
    %v232 = vunpack.c.l.b16 %v37
    %v233 = vunpack.c.l.b16 %v38
    %v234 = vunpack.c.l.b16 %v39
    %v235 = vunpack.c.l.b16 %v40
    %v236 = vunpack.c.l.b16 %v41
    %v237 = vunpack.c.l.b16 %v42
    %v238 = vunpack.c.l.b16 %v43
    %v239 = vunpack.c.l.b16 %v44
    %v240 = vunpack.c.l.b16 %v45
    %v241 = vunpack.c.l.b16 %v46
    %v242 = vunpack.c.l.b16 %v47
    %v243 = vunpack.c.l.b16 %v48
    %v244 = vunpack.c.l.b16 %v49
    %v245 = vunpack.c.l.b16 %v50
    %v246 = vunpack.c.l.b16 %v51
    %v247 = vunpack.c.l.b16 %v52
    %v248 = vunpack.c.l.b16 %v53
    %v249 = vunpack.c.l.b16 %v54
    %v250 = vunpack.c.l.b16 %v55
    %v251 = vunpack.c.l.b16 %v56
    %v252 = vunpack.c.l.b16 %v57
    %v253 = vunpack.c.l.b16 %v58
    %v254 = vunpack.c.l.b16 %v59
    %v255 = vunpack.c.l.b16 %v60
    %v256 = vunpack.c.l.b16 %v61
    %v257 = vunpack.c.l.b16 %v62
    %v258 = vunpack.c.l.b16 %v63
    %v259 = vunpack.c.l.b16 %v64
    %v260 = vunpack.c.l.b16 %v65
    %v261 = vunpack.c.l.b16 %v66
    %v262 = vunpack.c.l.b16 %v67
    %v263 = vunpack.c.l.b16 %v68
    %v264 = vunpack.c.l.b16 %v69
    %v265 = vunpack.c.l.b16 %v70
    %v266 = vunpack.c.l.b16 %v71
    %v267 = vunpack.c.l.b16 %v72
    %v268 = vunpack.c.l.b16 %v73
    %v269 = vunpack.c.l.b16 %v74
    %v270 = vunpack.c.l.b16 %v75
    %v271 = vunpack.c.l.b16 %v76
    %v272 = vunpack.c.l.b16 %v77
    %v273 = vunpack.c.l.b16 %v78
    %v274 = vunpack.c.l.b16 %v79
    %v275 = vunpack.c.l.b16 %v80
    %v276 = vunpack.c.l.b16 %v81
    %v277 = vunpack.c.l.b16 %v82
    %v278 = vunpack.c.l.b16 %v83
    %v279 = vunpack.c.l.b16 %v84
    %v280 = vunpack.c.l.b16 %v85
    %v281 = vunpack.c.l.b16 %v86
    %v282 = vunpack.c.l.b16 %v87
    %v283 = vunpack.c.l.b16 %v88
    %v284 = vunpack.c.l.b16 %v89
    %v285 = vunpack.c.l.b16 %v90
    %v286 = vunpack.c.l.b16 %v91
    %v287 = vunpack.c.l.b16 %v92
    %v288 = vunpack.c.l.b16 %v93
    %v289 = vunpack.c.l.b16 %v94
    %v290 = vunpack.c.l.b16 %v95
    %v291 = vunpack.c.l.b16 %v96
    %v292 = vunpack.c.l.b16 %v97
    %v293 = vunpack.c.l.b16 %v98
    %v294 = vunpack.c.l.b16 %v99
    %v295 = vunpack.c.l.b16 %v100
    %v296 = vunpack.c.l.b16 %v101
    %v297 = vunpack.c.l.b16 %v102
    %v298 = vunpack.c.l.b16 %v103
    %v299 = vunpack.c.l.b16 %v104
    %v300 = vunpack.c.l.b16 %v105
    %v301 = vpack.c.b16 %v230, %v229
    %v302 = vpack.c.b16 %v232, %v231
    %v303 = vpack.c.b16 %v234, %v233
    %v304 = vpack.c.b16 %v236, %v235
    %v305 = vpack.c.b16 %v238, %v237
    %v306 = vpack.c.b16 %v240, %v239
    %v307 = vpack.c.b16 %v242, %v241
    %v308 = vpack.c.b16 %v244, %v243
    %v309 = vpack.c.b16 %v246, %v245
    %v310 = vpack.c.b16 %v248, %v247
    %v311 = vpack.c.b16 %v250, %v249
    %v312 = vpack.c.b16 %v252, %v251
    %v313 = vpack.c.b16 %v254, %v253
    %v314 = vpack.c.b16 %v256, %v255
    %v315 = vpack.c.b16 %v258, %v257
    %v316 = vpack.c.b16 %v260, %v259
    %v317 = vpack.c.b16 %v262, %v261
    %v318 = vpack.c.b16 %v264, %v263
    %v319 = vpack.c.b16 %v266, %v265
    %v320 = vpack.c.b16 %v268, %v267
    %v321 = vpack.c.b16 %v270, %v269
    %v322 = vpack.c.b16 %v272, %v271
    %v323 = vpack.c.b16 %v274, %v273
    %v324 = vpack.c.b16 %v276, %v275
    %v325 = vpack.c.b16 %v278, %v277
    %v326 = vpack.c.b16 %v280, %v279
    %v327 = vpack.c.b16 %v282, %v281
    %v328 = vpack.c.b16 %v284, %v283
    %v329 = vpack.c.b16 %v286, %v285
    %v330 = vpack.c.b16 %v288, %v287
    %v331 = vpack.c.b16 %v290, %v289
    %v332 = vpack.c.b16 %v292, %v291
    %v333 = vpack.c.b16 %v294, %v293
    %v334 = vpack.c.b16 %v296, %v295
    %v335 = vpack.c.b16 %v298, %v297
    %v336 = vpack.c.b16 %v300, %v299
    %vm373 = vcmask 523264
    %v375 = vsel %vm373, %v143, 0
    %377 = vmatprep.subr.bf16.mxu0 0
    %378 = vmatpush1.bf16.msra.mxu0 %v301
    %379 = vmatprep.subr.bf16.mxu0 0
    %380 = vmatpush1.bf16.msra.mxu0 %v302
    %381 = vmatprep.subr.bf16.mxu0 0
    %382 = vmatpush1.bf16.msra.mxu0 %v303
    %383 = vmatprep.subr.bf16.mxu0 0
    %384 = vmatpush1.bf16.msra.mxu0 %v304
    %385 = vmatprep.subr.bf16.mxu0 0
    %386 = vmatpush1.bf16.msra.mxu0 %v305
    %387 = vmatprep.subr.bf16.mxu0 0
    %388 = vmatpush1.bf16.msra.mxu0 %v306
    %389 = vmatprep.subr.bf16.mxu0 0
    %390 = vmatpush1.bf16.msra.mxu0 %v307
    %391 = vmatprep.subr.bf16.mxu0 0
    %392 = vmatpush1.bf16.msra.mxu0 %v308
    %393 = vmatprep.subr.bf16.mxu0 0
    %394 = vmatpush1.bf16.msra.mxu0 %v309
    %395 = vmatprep.subr.bf16.mxu0 0
    %396 = vmatpush1.bf16.msra.mxu0 %v310
    %397 = vmatprep.subr.bf16.mxu0 0
    %398 = vmatpush1.bf16.msra.mxu0 %v311
    %399 = vmatprep.subr.bf16.mxu0 0
    %400 = vmatpush1.bf16.msra.mxu0 %v312
    %401 = vmatprep.subr.bf16.mxu0 0
    %402 = vmatpush1.bf16.msra.mxu0 %v313
    %403 = vmatprep.subr.bf16.mxu0 0
    %404 = vmatpush1.bf16.msra.mxu0 %v314
    %405 = vmatprep.subr.bf16.mxu0 0
    %406 = vmatpush1.bf16.msra.mxu0 %v315
    %407 = vmatprep.subr.bf16.mxu0 0
    %408 = vmatpush1.bf16.msra.mxu0 %v316
    %409 = vmatprep.mubr.bf16.mxu0 %v150
    %410 = vmatmul.mubr.bf16.gmra.mrb[0].mxu0 %v136
    %v411 = vpop.f32.mrb[0].mxu0
    %v412 = vadd.f32 %v111, %v411
    %v413 = vpop.f32.mrb[0].mxu0
    %v414 = vpop.f32.mrb[0].mxu0
    %v415 = vpop.f32.mrb[0].mxu0
    %416 = vdwg.mxu0
    %417 = vmatprep.subr.bf16.mxu0 0
    %418 = vmatpush1.bf16.msra.mxu0 %v317
    %419 = vmatprep.subr.bf16.mxu0 0
    %420 = vmatpush1.bf16.msra.mxu0 %v318
    %421 = vmatprep.subr.bf16.mxu0 0
    %422 = vmatpush1.bf16.msra.mxu0 %v319
    %423 = vmatprep.subr.bf16.mxu0 0
    %424 = vmatpush1.bf16.msra.mxu0 %v320
    %425 = vmatprep.subr.bf16.mxu0 0
    %426 = vmatpush1.bf16.msra.mxu0 %v321
    %427 = vmatprep.subr.bf16.mxu0 0
    %428 = vmatpush1.bf16.msra.mxu0 %v322
    %429 = vmatprep.subr.bf16.mxu0 0
    %430 = vmatpush1.bf16.msra.mxu0 %v323
    %431 = vmatprep.subr.bf16.mxu0 0
    %432 = vmatpush1.bf16.msra.mxu0 %v324
    %433 = vmatprep.subr.bf16.mxu0 0
    %434 = vmatpush1.bf16.msra.mxu0 %v325
    %435 = vmatprep.subr.bf16.mxu0 0
    %436 = vmatpush1.bf16.msra.mxu0 %v326
    %437 = vmatprep.subr.bf16.mxu0 0
    %438 = vmatpush1.bf16.msra.mxu0 %v327
    %439 = vmatprep.subr.bf16.mxu0 0
    %440 = vmatpush1.bf16.msra.mxu0 %v328
    %441 = vmatprep.subr.bf16.mxu0 0
    %442 = vmatpush1.bf16.msra.mxu0 %v329
    %443 = vmatprep.subr.bf16.mxu0 0
    %444 = vmatpush1.bf16.msra.mxu0 %v330
    %445 = vmatprep.subr.bf16.mxu0 0
    %446 = vmatpush1.bf16.msra.mxu0 %v331
    %447 = vmatprep.subr.bf16.mxu0 0
    %448 = vmatpush1.bf16.msra.mxu0 %v332
    %449 = vmatprep.mubr.bf16.mxu0 %v152
    %450 = vmatmul.mubr.bf16.gmra.mrb[0].mxu0 %v151
    %v451 = vpop.f32.mrb[0].mxu0
    %v452 = vadd.f32 %v412, %v451
    %v453 = vpop.f32.mrb[0].mxu0
    %v454 = vpop.f32.mrb[0].mxu0
    %v455 = vpop.f32.mrb[0].mxu0
    %456 = vdwg.mxu0
    %457 = vmatprep.subr.bf16.mxu0 0
    %458 = vmatpush1.bf16.msra.mxu0 %v333
    %459 = vmatprep.subr.bf16.mxu0 0
    %460 = vmatpush1.bf16.msra.mxu0 %v334
    %461 = vmatprep.subr.bf16.mxu0 0
    %462 = vmatpush1.bf16.msra.mxu0 %v335
    %463 = vmatprep.subr.bf16.mxu0 0
    %464 = vmatpush1.bf16.msra.mxu0 %v336
    %465 = vmatprep.subr.bf16.mxu0 0
    %466 = vmatpush1.bf16.msra.mxu0 0
    %467 = vmatprep.subr.bf16.mxu0 0
    %468 = vmatpush1.bf16.msra.mxu0 0
    %469 = vmatprep.subr.bf16.mxu0 0
    %470 = vmatpush1.bf16.msra.mxu0 0
    %471 = vmatprep.subr.bf16.mxu0 0
    %472 = vmatpush1.bf16.msra.mxu0 0
    %473 = vmatprep.subr.bf16.mxu0 0
    %474 = vmatpush1.bf16.msra.mxu0 0
    %475 = vmatprep.subr.bf16.mxu0 0
    %476 = vmatpush1.bf16.msra.mxu0 0
    %477 = vmatprep.subr.bf16.mxu0 0
    %478 = vmatpush1.bf16.msra.mxu0 0
    %479 = vmatprep.subr.bf16.mxu0 0
    %480 = vmatpush1.bf16.msra.mxu0 0
    %481 = vmatprep.subr.bf16.mxu0 0
    %482 = vmatpush1.bf16.msra.mxu0 0
    %483 = vmatprep.subr.bf16.mxu0 0
    %484 = vmatpush1.bf16.msra.mxu0 0
    %485 = vmatprep.subr.bf16.mxu0 0
    %486 = vmatpush1.bf16.msra.mxu0 0
    %487 = vmatprep.subr.bf16.mxu0 0
    %488 = vmatpush1.bf16.msra.mxu0 0
    %489 = vmatprep.mubr.bf16.mxu0 0
    %490 = vmatmul.mubr.bf16.gmra.mrb[0].mxu0 %v375
    %v491 = vpop.f32.mrb[0].mxu0
    %v492 = vadd.f32 %v452, %v491
    %v493 = vpop.f32.mrb[0].mxu0
    %v494 = vpop.f32.mrb[0].mxu0
    %v495 = vpop.f32.mrb[0].mxu0
    %496 = vdwg.mxu0
    %v497 = vmax.f32 %v492, 0.0
    %v498 = vld [vmem:[#allocation2] sm:$0xff]
    %v499 = vpack.c.bf16 %v497, %v497
    %v500 = vld [vmem:[%s3] sm:$0xff]
    %v501 = vld [vmem:[%s3 + $0x8] sm:$0xff]
    %v502 = vld [vmem:[%s3 + $0x10] sm:$0xff]
    %v503 = vld [vmem:[%s3 + $0x18] sm:$0xff]
    %v504 = vld [vmem:[%s3 + $0x20] sm:$0xff]
    %v505 = vld [vmem:[%s3 + $0x28] sm:$0xff]
    %v506 = vld [vmem:[%s3 + $0x30] sm:$0xff]
    %v507 = vld [vmem:[%s3 + $0x38] sm:$0xff]
    %v508 = vld [vmem:[%s3 + $0x40] sm:$0xff]
    %v509 = vld [vmem:[%s3 + $0x48] sm:$0xff]
    %v510 = vld [vmem:[%s3 + $0x50] sm:$0xff]
    %v511 = vld [vmem:[%s3 + $0x58] sm:$0xff]
    %v512 = vld [vmem:[%s3 + $0x60] sm:$0xff]
    %v513 = vld [vmem:[%s3 + $0x68] sm:$0xff]
    %v514 = vld [vmem:[%s3 + $0x70] sm:$0xff]
    %v515 = vld [vmem:[%s3 + $0x78] sm:$0xff]
    %v532 = vunpack.c.l.b16 %v500
    %v533 = vunpack.c.h.b16 %v500
    %v534 = vunpack.c.l.b16 %v501
    %v535 = vunpack.c.h.b16 %v501
    %v536 = vunpack.c.l.b16 %v502
    %v537 = vunpack.c.h.b16 %v502
    %v538 = vunpack.c.l.b16 %v503
    %v539 = vunpack.c.h.b16 %v503
    %v540 = vunpack.c.l.b16 %v504
    %v541 = vunpack.c.h.b16 %v504
    %v542 = vunpack.c.l.b16 %v505
    %v543 = vunpack.c.h.b16 %v505
    %v544 = vunpack.c.l.b16 %v506
    %v545 = vunpack.c.h.b16 %v506
    %v546 = vunpack.c.l.b16 %v507
    %v547 = vunpack.c.h.b16 %v507
    %v548 = vunpack.c.l.b16 %v508
    %v549 = vunpack.c.h.b16 %v508
    %v550 = vunpack.c.l.b16 %v509
    %v551 = vunpack.c.h.b16 %v509
    %v552 = vunpack.c.l.b16 %v510
    %v553 = vunpack.c.h.b16 %v510
    %v554 = vunpack.c.l.b16 %v511
    %v555 = vunpack.c.h.b16 %v511
    %v556 = vunpack.c.l.b16 %v512
    %v557 = vunpack.c.h.b16 %v512
    %v558 = vunpack.c.l.b16 %v513
    %v559 = vunpack.c.h.b16 %v513
    %v560 = vunpack.c.l.b16 %v514
    %v561 = vunpack.c.h.b16 %v514
    %v562 = vunpack.c.l.b16 %v515
    %v563 = vunpack.c.h.b16 %v515
    %v564 = vpack.c.b16 %v536, %v532
    %v565 = vpack.c.b16 %v537, %v533
    %v566 = vpack.c.b16 %v538, %v534
    %v567 = vpack.c.b16 %v539, %v535
    %v568 = vpack.c.b16 %v544, %v540
    %v569 = vpack.c.b16 %v545, %v541
    %v570 = vpack.c.b16 %v546, %v542
    %v571 = vpack.c.b16 %v547, %v543
    %v572 = vpack.c.b16 %v552, %v548
    %v573 = vpack.c.b16 %v553, %v549
    %v574 = vpack.c.b16 %v554, %v550
    %v575 = vpack.c.b16 %v555, %v551
    %v576 = vpack.c.b16 %v560, %v556
    %v577 = vpack.c.b16 %v561, %v557
    %v578 = vpack.c.b16 %v562, %v558
    %v579 = vpack.c.b16 %v563, %v559
    %v597 = vsel %vm373, %v499, 0
    %599 = vmatprep.subr.bf16.mxu0 %v565
    %600 = vmatpush1.bf16.msra.mxu0 %v564
    %601 = vmatprep.subr.bf16.mxu0 %v569
    %602 = vmatpush1.bf16.msra.mxu0 %v568
    %603 = vmatprep.subr.bf16.mxu0 %v573
    %604 = vmatpush1.bf16.msra.mxu0 %v572
    %605 = vmatprep.subr.bf16.mxu0 %v577
    %606 = vmatpush1.bf16.msra.mxu0 %v576
    %607 = vmatprep.subr.bf16.mxu0 0
    %608 = vmatpush1.bf16.msra.mxu0 0
    %609 = vmatprep.subr.bf16.mxu0 0
    %610 = vmatpush1.bf16.msra.mxu0 0
    %611 = vmatprep.subr.bf16.mxu0 0
    %612 = vmatpush1.bf16.msra.mxu0 0
    %613 = vmatprep.subr.bf16.mxu0 0
    %614 = vmatpush1.bf16.msra.mxu0 0
    %615 = vmatprep.subr.bf16.mxu0 0
    %616 = vmatpush1.bf16.msra.mxu0 0
    %617 = vmatprep.subr.bf16.mxu0 0
    %618 = vmatpush1.bf16.msra.mxu0 0
    %619 = vmatprep.subr.bf16.mxu0 0
    %620 = vmatpush1.bf16.msra.mxu0 0
    %621 = vmatprep.subr.bf16.mxu0 0
    %622 = vmatpush1.bf16.msra.mxu0 0
    %623 = vmatprep.subr.bf16.mxu0 0
    %624 = vmatpush1.bf16.msra.mxu0 0
    %625 = vmatprep.subr.bf16.mxu0 0
    %626 = vmatpush1.bf16.msra.mxu0 0
    %627 = vmatprep.subr.bf16.mxu0 0
    %628 = vmatpush1.bf16.msra.mxu0 0
    %629 = vmatprep.subr.bf16.mxu0 0
    %630 = vmatpush1.bf16.msra.mxu0 0
    %631 = vmatprep.mubr.bf16.mxu0 0
    %632 = vmatmul.mubr.bf16.gmra.mrb[0].mxu0 %v597
    %v633 = vpop.f32.mrb[0].mxu0
    %v634 = vadd.f32 0.0, %v633
    %v635 = vpop.f32.mrb[0].mxu0
    %v636 = vadd.f32 0.0, %v635
    %v637 = vpop.f32.mrb[0].mxu0
    %v638 = vpop.f32.mrb[0].mxu0
    %639 = vdwg.mxu0
    %640 = vmatprep.subr.bf16.mxu0 %v567
    %641 = vmatpush1.bf16.msra.mxu0 %v566
    %642 = vmatprep.subr.bf16.mxu0 %v571
    %643 = vmatpush1.bf16.msra.mxu0 %v570
    %644 = vmatprep.subr.bf16.mxu0 %v575
    %645 = vmatpush1.bf16.msra.mxu0 %v574
    %646 = vmatprep.subr.bf16.mxu0 %v579
    %647 = vmatpush1.bf16.msra.mxu0 %v578
    %648 = vmatprep.subr.bf16.mxu0 0
    %649 = vmatpush1.bf16.msra.mxu0 0
    %650 = vmatprep.subr.bf16.mxu0 0
    %651 = vmatpush1.bf16.msra.mxu0 0
    %652 = vmatprep.subr.bf16.mxu0 0
    %653 = vmatpush1.bf16.msra.mxu0 0
    %654 = vmatprep.subr.bf16.mxu0 0
    %655 = vmatpush1.bf16.msra.mxu0 0
    %656 = vmatprep.subr.bf16.mxu0 0
    %657 = vmatpush1.bf16.msra.mxu0 0
    %658 = vmatprep.subr.bf16.mxu0 0
    %659 = vmatpush1.bf16.msra.mxu0 0
    %660 = vmatprep.subr.bf16.mxu0 0
    %661 = vmatpush1.bf16.msra.mxu0 0
    %662 = vmatprep.subr.bf16.mxu0 0
    %663 = vmatpush1.bf16.msra.mxu0 0
    %664 = vmatprep.subr.bf16.mxu0 0
    %665 = vmatpush1.bf16.msra.mxu0 0
    %666 = vmatprep.subr.bf16.mxu0 0
    %667 = vmatpush1.bf16.msra.mxu0 0
    %668 = vmatprep.subr.bf16.mxu0 0
    %669 = vmatpush1.bf16.msra.mxu0 0
    %670 = vmatprep.subr.bf16.mxu0 0
    %671 = vmatpush1.bf16.msra.mxu0 0
    %672 = vmatprep.mubr.bf16.mxu0 0
    %673 = vmatmul.mubr.bf16.gmra.mrb[0].mxu0 %v597
    %v674 = vpop.f32.mrb[0].mxu0
    %v675 = vadd.f32 0.0, %v674
    %v676 = vpop.f32.mrb[0].mxu0
    %v677 = vadd.f32 0.0, %v676
    %v678 = vpop.f32.mrb[0].mxu0
    %v679 = vpop.f32.mrb[0].mxu0
    %680 = vdwg.mxu0
    %v685 = vcombine.low %v634, %v636
    %v686 = vcombine.low %v675, %v677
    %v688 = vunpack.c.l.s4 1983009808
    %v689 = vunpack.c.0.s8 %v688
    %v690 = vlaneseq
    %v691 = vshrl.u32 %v690, 7
    %v692 = vsub.s32 %v689, %v691
    %v693 = vrot.slane %v685, %v692
    %v695 = vunpack.c.l.s4 1983009808
    %v696 = vunpack.c.0.s8 %v695
    %v697 = vlaneseq
    %v698 = vshrl.u32 %v697, 7
    %v699 = vsub.s32 %v696, %v698
    %v700 = vrot.slane %v686, %v699
    %v701 = vcombine.low %v693, %v700
    %v703 = vadd.f32 %v498, %v701
    %704 = vst [vmem:[#allocation2] sm:$0xff] %v703
    // Predicated region
    $region34: #{dqn_forward.5} parent=1 // pred_check
      %p705 = pneg %p28
    $region35: #{dqn_forward.5} parent=1 // pred_check_branch
      %707 = sbr.rel (%p705) target = $region37
    $region36: #{dqn_forward.5} parent=1 // pred_region
      %v708 = vld [vmem:[#allocation2] sm:$0xff]
      %v709 = vld [vmem:[%s4] sm:$0xf]
      %v711 = vlaneseq
      %v712 = vshrl.u32 %v711, 7
      %v713 = vsub.s32 0, %v712
      %v714 = vrot.slane %v709, %v713
      %v715 = vlaneseq
      %v716 = vshrl.u32 %v715, 7
      %v717 = vsub.s32 1, %v716
      %v718 = vrot.slane %v709, %v717
      %v719 = vlaneseq
      %v720 = vshrl.u32 %v719, 7
      %v721 = vsub.s32 2, %v720
      %v722 = vrot.slane %v709, %v721
      %v723 = vlaneseq
      %v724 = vshrl.u32 %v723, 7
      %v725 = vsub.s32 3, %v724
      %v726 = vrot.slane %v709, %v725
      %v727 = vcombine.low %v714, %v718
      %v728 = vcombine.low %v722, %v726
      %v730 = vunpack.c.l.s4 1983009808
      %v731 = vunpack.c.0.s8 %v730
      %v732 = vlaneseq
      %v733 = vshrl.u32 %v732, 7
      %v734 = vsub.s32 %v731, %v733
      %v735 = vrot.slane %v727, %v734
      %v737 = vunpack.c.l.s4 1983009808
      %v738 = vunpack.c.0.s8 %v737
      %v739 = vlaneseq
      %v740 = vshrl.u32 %v739, 7
      %v741 = vsub.s32 %v738, %v740
      %v742 = vrot.slane %v728, %v741
      %v743 = vcombine.low %v735, %v742
      %v745 = vadd.f32 %v708, %v743
      %v746 = vmax.f32 %v745, 0.0
      %v748 = vcombine.high %v746, %v746
      %v750 = vunpack.c.l.s4 1983009808
      %v751 = vunpack.c.0.s8 %v750
      %v752 = vlaneseq
      %v753 = vshrl.u32 %v752, 7
      %v754 = vsub.s32 %v751, %v753
      %v755 = vrot.slane %v746, %v754
      %v757 = vunpack.c.l.s4 1983009808
      %v758 = vunpack.c.0.s8 %v757
      %v759 = vlaneseq
      %v760 = vshrl.u32 %v759, 7
      %v761 = vsub.s32 %v758, %v760
      %v762 = vrot.slane %v748, %v761
      %v763 = vcombine.high %v755, %v755
      %v764 = vcombine.high %v762, %v762
      %v769 = vpack.c.bf16 %v755, %v755
      %v770 = vpack.c.bf16 %v763, %v763
      %v771 = vpack.c.bf16 %v762, %v762
      %v772 = vpack.c.bf16 %v764, %v764
      %v773 = vld [vmem:[%s5] sm:$0xf]
      %v774 = vld [vmem:[%s5 + $0x4] sm:$0xf]
      %v775 = vld [vmem:[%s5 + $0x8] sm:$0xf]
      %v776 = vld [vmem:[%s5 + $0xc] sm:$0xf]
      %v777 = vld [vmem:[%s5 + $0x10] sm:$0xf]
      %v778 = vld [vmem:[%s5 + $0x14] sm:$0xf]
      %v779 = vld [vmem:[%s5 + $0x18] sm:$0xf]
      %v780 = vld [vmem:[%s5 + $0x1c] sm:$0xf]
      %v781 = vld [vmem:[%s5 + $0x20] sm:$0xf]
      %v782 = vld [vmem:[%s5 + $0x24] sm:$0xf]
      %v783 = vld [vmem:[%s5 + $0x28] sm:$0xf]
      %v784 = vld [vmem:[%s5 + $0x2c] sm:$0xf]
      %v785 = vld [vmem:[%s5 + $0x30] sm:$0xf]
      %v786 = vld [vmem:[%s5 + $0x34] sm:$0xf]
      %v787 = vld [vmem:[%s5 + $0x38] sm:$0xf]
      %v788 = vld [vmem:[%s5 + $0x3c] sm:$0xf]
      %v789 = vld [vmem:[%s5 + $0x40] sm:$0xf]
      %v790 = vld [vmem:[%s5 + $0x44] sm:$0xf]
      %v791 = vld [vmem:[%s5 + $0x48] sm:$0xf]
      %v792 = vld [vmem:[%s5 + $0x4c] sm:$0xf]
      %v793 = vld [vmem:[%s5 + $0x50] sm:$0xf]
      %v794 = vld [vmem:[%s5 + $0x54] sm:$0xf]
      %v795 = vld [vmem:[%s5 + $0x58] sm:$0xf]
      %v796 = vld [vmem:[%s5 + $0x5c] sm:$0xf]
      %v797 = vld [vmem:[%s5 + $0x60] sm:$0xf]
      %v798 = vld [vmem:[%s5 + $0x64] sm:$0xf]
      %v799 = vld [vmem:[%s5 + $0x68] sm:$0xf]
      %v800 = vld [vmem:[%s5 + $0x6c] sm:$0xf]
      %v801 = vld [vmem:[%s5 + $0x70] sm:$0xf]
      %v802 = vld [vmem:[%s5 + $0x74] sm:$0xf]
      %v803 = vld [vmem:[%s5 + $0x78] sm:$0xf]
      %v804 = vld [vmem:[%s5 + $0x7c] sm:$0xf]
      %v805 = vld [vmem:[%s5 + $0x80] sm:$0xf]
      %v806 = vld [vmem:[%s5 + $0x84] sm:$0xf]
      %v807 = vld [vmem:[%s5 + $0x88] sm:$0xf]
      %v808 = vld [vmem:[%s5 + $0x8c] sm:$0xf]
      %v809 = vld [vmem:[%s5 + $0x90] sm:$0xf]
      %v810 = vld [vmem:[%s5 + $0x94] sm:$0xf]
      %v811 = vld [vmem:[%s5 + $0x98] sm:$0xf]
      %v812 = vld [vmem:[%s5 + $0x9c] sm:$0xf]
      %v813 = vld [vmem:[%s5 + $0xa0] sm:$0xf]
      %v814 = vld [vmem:[%s5 + $0xa4] sm:$0xf]
      %v815 = vld [vmem:[%s5 + $0xa8] sm:$0xf]
      %v816 = vld [vmem:[%s5 + $0xac] sm:$0xf]
      %v817 = vld [vmem:[%s5 + $0xb0] sm:$0xf]
      %v818 = vld [vmem:[%s5 + $0xb4] sm:$0xf]
      %v819 = vld [vmem:[%s5 + $0xb8] sm:$0xf]
      %v820 = vld [vmem:[%s5 + $0xbc] sm:$0xf]
      %v821 = vld [vmem:[%s5 + $0xc0] sm:$0xf]
      %v822 = vld [vmem:[%s5 + $0xc4] sm:$0xf]
      %v823 = vld [vmem:[%s5 + $0xc8] sm:$0xf]
      %v824 = vld [vmem:[%s5 + $0xcc] sm:$0xf]
      %v825 = vld [vmem:[%s5 + $0xd0] sm:$0xf]
      %v826 = vld [vmem:[%s5 + $0xd4] sm:$0xf]
      %v827 = vld [vmem:[%s5 + $0xd8] sm:$0xf]
      %v828 = vld [vmem:[%s5 + $0xdc] sm:$0xf]
      %v829 = vld [vmem:[%s5 + $0xe0] sm:$0xf]
      %v830 = vld [vmem:[%s5 + $0xe4] sm:$0xf]
      %v831 = vld [vmem:[%s5 + $0xe8] sm:$0xf]
      %v832 = vld [vmem:[%s5 + $0xec] sm:$0xf]
      %v833 = vld [vmem:[%s5 + $0xf0] sm:$0xf]
      %v834 = vld [vmem:[%s5 + $0xf4] sm:$0xf]
      %v835 = vld [vmem:[%s5 + $0xf8] sm:$0xf]
      %v836 = vld [vmem:[%s5 + $0xfc] sm:$0xf]
      %v837 = vld [vmem:[%s6] sm:$0x1]
      %v839 = vlaneseq
      %v840 = vshrl.u32 %v839, 7
      %v841 = vsub.s32 0, %v840
      %v842 = vrot.slane %v837, %v841
      %v908 = vunpack.c.l.b16 %v773
      %v909 = vunpack.c.l.b16 %v774
      %v910 = vunpack.c.l.b16 %v775
      %v911 = vunpack.c.l.b16 %v776
      %v912 = vunpack.c.l.b16 %v777
      %v913 = vunpack.c.l.b16 %v778
      %v914 = vunpack.c.l.b16 %v779
      %v915 = vunpack.c.l.b16 %v780
      %v916 = vunpack.c.l.b16 %v781
      %v917 = vunpack.c.l.b16 %v782
      %v918 = vunpack.c.l.b16 %v783
      %v919 = vunpack.c.l.b16 %v784
      %v920 = vunpack.c.l.b16 %v785
      %v921 = vunpack.c.l.b16 %v786
      %v922 = vunpack.c.l.b16 %v787
      %v923 = vunpack.c.l.b16 %v788
      %v924 = vunpack.c.l.b16 %v789
      %v925 = vunpack.c.l.b16 %v790
      %v926 = vunpack.c.l.b16 %v791
      %v927 = vunpack.c.l.b16 %v792
      %v928 = vunpack.c.l.b16 %v793
      %v929 = vunpack.c.l.b16 %v794
      %v930 = vunpack.c.l.b16 %v795
      %v931 = vunpack.c.l.b16 %v796
      %v932 = vunpack.c.l.b16 %v797
      %v933 = vunpack.c.l.b16 %v798
      %v934 = vunpack.c.l.b16 %v799
      %v935 = vunpack.c.l.b16 %v800
      %v936 = vunpack.c.l.b16 %v801
      %v937 = vunpack.c.l.b16 %v802
      %v938 = vunpack.c.l.b16 %v803
      %v939 = vunpack.c.l.b16 %v804
      %v940 = vunpack.c.l.b16 %v805
      %v941 = vunpack.c.l.b16 %v806
      %v942 = vunpack.c.l.b16 %v807
      %v943 = vunpack.c.l.b16 %v808
      %v944 = vunpack.c.l.b16 %v809
      %v945 = vunpack.c.l.b16 %v810
      %v946 = vunpack.c.l.b16 %v811
      %v947 = vunpack.c.l.b16 %v812
      %v948 = vunpack.c.l.b16 %v813
      %v949 = vunpack.c.l.b16 %v814
      %v950 = vunpack.c.l.b16 %v815
      %v951 = vunpack.c.l.b16 %v816
      %v952 = vunpack.c.l.b16 %v817
      %v953 = vunpack.c.l.b16 %v818
      %v954 = vunpack.c.l.b16 %v819
      %v955 = vunpack.c.l.b16 %v820
      %v956 = vunpack.c.l.b16 %v821
      %v957 = vunpack.c.l.b16 %v822
      %v958 = vunpack.c.l.b16 %v823
      %v959 = vunpack.c.l.b16 %v824
      %v960 = vunpack.c.l.b16 %v825
      %v961 = vunpack.c.l.b16 %v826
      %v962 = vunpack.c.l.b16 %v827
      %v963 = vunpack.c.l.b16 %v828
      %v964 = vunpack.c.l.b16 %v829
      %v965 = vunpack.c.l.b16 %v830
      %v966 = vunpack.c.l.b16 %v831
      %v967 = vunpack.c.l.b16 %v832
      %v968 = vunpack.c.l.b16 %v833
      %v969 = vunpack.c.l.b16 %v834
      %v970 = vunpack.c.l.b16 %v835
      %v971 = vunpack.c.l.b16 %v836
      %v972 = vpack.c.b16 %v909, %v908
      %v973 = vpack.c.b16 %v911, %v910
      %v974 = vpack.c.b16 %v913, %v912
      %v975 = vpack.c.b16 %v915, %v914
      %v976 = vpack.c.b16 %v917, %v916
      %v977 = vpack.c.b16 %v919, %v918
      %v978 = vpack.c.b16 %v921, %v920
      %v979 = vpack.c.b16 %v923, %v922
      %v980 = vpack.c.b16 %v925, %v924
      %v981 = vpack.c.b16 %v927, %v926
      %v982 = vpack.c.b16 %v929, %v928
      %v983 = vpack.c.b16 %v931, %v930
      %v984 = vpack.c.b16 %v933, %v932
      %v985 = vpack.c.b16 %v935, %v934
      %v986 = vpack.c.b16 %v937, %v936
      %v987 = vpack.c.b16 %v939, %v938
      %v988 = vpack.c.b16 %v941, %v940
      %v989 = vpack.c.b16 %v943, %v942
      %v990 = vpack.c.b16 %v945, %v944
      %v991 = vpack.c.b16 %v947, %v946
      %v992 = vpack.c.b16 %v949, %v948
      %v993 = vpack.c.b16 %v951, %v950
      %v994 = vpack.c.b16 %v953, %v952
      %v995 = vpack.c.b16 %v955, %v954
      %v996 = vpack.c.b16 %v957, %v956
      %v997 = vpack.c.b16 %v959, %v958
      %v998 = vpack.c.b16 %v961, %v960
      %v999 = vpack.c.b16 %v963, %v962
      %v1000 = vpack.c.b16 %v965, %v964
      %v1001 = vpack.c.b16 %v967, %v966
      %v1002 = vpack.c.b16 %v969, %v968
      %v1003 = vpack.c.b16 %v971, %v970
      %1036 = vmatprep.subr.bf16.mxu0 0
      %1037 = vmatpush1.bf16.msra.mxu0 %v972
      %1038 = vmatprep.subr.bf16.mxu0 0
      %1039 = vmatpush1.bf16.msra.mxu0 %v973
      %1040 = vmatprep.subr.bf16.mxu0 0
      %1041 = vmatpush1.bf16.msra.mxu0 %v974
      %1042 = vmatprep.subr.bf16.mxu0 0
      %1043 = vmatpush1.bf16.msra.mxu0 %v975
      %1044 = vmatprep.subr.bf16.mxu0 0
      %1045 = vmatpush1.bf16.msra.mxu0 %v976
      %1046 = vmatprep.subr.bf16.mxu0 0
      %1047 = vmatpush1.bf16.msra.mxu0 %v977
      %1048 = vmatprep.subr.bf16.mxu0 0
      %1049 = vmatpush1.bf16.msra.mxu0 %v978
      %1050 = vmatprep.subr.bf16.mxu0 0
      %1051 = vmatpush1.bf16.msra.mxu0 %v979
      %1052 = vmatprep.subr.bf16.mxu0 0
      %1053 = vmatpush1.bf16.msra.mxu0 %v980
      %1054 = vmatprep.subr.bf16.mxu0 0
      %1055 = vmatpush1.bf16.msra.mxu0 %v981
      %1056 = vmatprep.subr.bf16.mxu0 0
      %1057 = vmatpush1.bf16.msra.mxu0 %v982
      %1058 = vmatprep.subr.bf16.mxu0 0
      %1059 = vmatpush1.bf16.msra.mxu0 %v983
      %1060 = vmatprep.subr.bf16.mxu0 0
      %1061 = vmatpush1.bf16.msra.mxu0 %v984
      %1062 = vmatprep.subr.bf16.mxu0 0
      %1063 = vmatpush1.bf16.msra.mxu0 %v985
      %1064 = vmatprep.subr.bf16.mxu0 0
      %1065 = vmatpush1.bf16.msra.mxu0 %v986
      %1066 = vmatprep.subr.bf16.mxu0 0
      %1067 = vmatpush1.bf16.msra.mxu0 %v987
      %1068 = vmatprep.mubr.bf16.mxu0 %v770
      %1069 = vmatmul.mubr.bf16.gmra.mrb[0].mxu0 %v769
      %v1070 = vpop.f32.mrb[0].mxu0
      %v1071 = vadd.f32 %v842, %v1070
      %v1072 = vpop.f32.mrb[0].mxu0
      %v1073 = vpop.f32.mrb[0].mxu0
      %v1074 = vpop.f32.mrb[0].mxu0
      %1075 = vdwg.mxu0
      %1076 = vmatprep.subr.bf16.mxu0 0
      %1077 = vmatpush1.bf16.msra.mxu0 %v988
      %1078 = vmatprep.subr.bf16.mxu0 0
      %1079 = vmatpush1.bf16.msra.mxu0 %v989
      %1080 = vmatprep.subr.bf16.mxu0 0
      %1081 = vmatpush1.bf16.msra.mxu0 %v990
      %1082 = vmatprep.subr.bf16.mxu0 0
      %1083 = vmatpush1.bf16.msra.mxu0 %v991
      %1084 = vmatprep.subr.bf16.mxu0 0
      %1085 = vmatpush1.bf16.msra.mxu0 %v992
      %1086 = vmatprep.subr.bf16.mxu0 0
      %1087 = vmatpush1.bf16.msra.mxu0 %v993
      %1088 = vmatprep.subr.bf16.mxu0 0
      %1089 = vmatpush1.bf16.msra.mxu0 %v994
      %1090 = vmatprep.subr.bf16.mxu0 0
      %1091 = vmatpush1.bf16.msra.mxu0 %v995
      %1092 = vmatprep.subr.bf16.mxu0 0
      %1093 = vmatpush1.bf16.msra.mxu0 %v996
      %1094 = vmatprep.subr.bf16.mxu0 0
      %1095 = vmatpush1.bf16.msra.mxu0 %v997
      %1096 = vmatprep.subr.bf16.mxu0 0
      %1097 = vmatpush1.bf16.msra.mxu0 %v998
      %1098 = vmatprep.subr.bf16.mxu0 0
      %1099 = vmatpush1.bf16.msra.mxu0 %v999
      %1100 = vmatprep.subr.bf16.mxu0 0
      %1101 = vmatpush1.bf16.msra.mxu0 %v1000
      %1102 = vmatprep.subr.bf16.mxu0 0
      %1103 = vmatpush1.bf16.msra.mxu0 %v1001
      %1104 = vmatprep.subr.bf16.mxu0 0
      %1105 = vmatpush1.bf16.msra.mxu0 %v1002
      %1106 = vmatprep.subr.bf16.mxu0 0
      %1107 = vmatpush1.bf16.msra.mxu0 %v1003
      %1108 = vmatprep.mubr.bf16.mxu0 %v772
      %1109 = vmatmul.mubr.bf16.gmra.mrb[0].mxu0 %v771
      %v1110 = vpop.f32.mrb[0].mxu0
      %v1111 = vadd.f32 %v1071, %v1110
      %v1112 = vpop.f32.mrb[0].mxu0
      %v1113 = vpop.f32.mrb[0].mxu0
      %v1114 = vpop.f32.mrb[0].mxu0
      %1115 = vdwg.mxu0
      %1116 = vst [vmem:[#allocation3] sm:$0x3] %v1111
    $region37: #{dqn_forward.5} parent=1 // pred_fallthru
      _
    // Predicated region
    $region38: #{dqn_forward.5} parent=1 // pred_check
      _
    $region39: #{dqn_forward.5} parent=1 // pred_check_branch
      %1118 = sbr.rel (0) target = $region41
    $region40: #{dqn_forward.5} parent=1 // pred_region
      %s1120 = ssub.s32 32, 32
      %1121 = vsyncadd [#allocation4], %s1120
      %s1123 = sshll.u32 [#allocation3], 4
      %s1124 = int_to_ptr.vmem [resolvable:$true] %s1123
      %1126 = dma.vmem_to_hbm [thread:$0]  %s1124, 32, %s7, [#allocation4]
    $region41: #{dqn_forward.5} parent=1 // pred_fallthru
      _
    // Predicated region
    $region42: #{dqn_forward.5} parent=1 // pred_check
      _
    $region43: #{dqn_forward.5} parent=1 // pred_check_branch
      %1128 = sbr.rel (0) target = $region45
    $region44: #{dqn_forward.5} parent=1 // pred_region
      %1129 = dma.done [#allocation4], 32
    $region45: #{dqn_forward.5} parent=1 // pred_fallthru
      _
    %1130 = vsyncpa [#allocation4], 1

</llo_original>
